<compile_context>
chip_gen: v7x
topology: tpu7x:2x2x1
jax: 0.10.0
libtpu: 0.0.40
codegen_flags: <defaults>
</compile_context>

<pallas_src>
import jax
import jax.numpy as jnp
from jax.experimental import pallas as pl
from jax.experimental.pallas import tpu as pltpu


def _round_up(x, m):
    return (x + m - 1) // m * m


def _ode_causal_att_kernel(
    # inputs
    t_ref,                           # SMEM (1,1) scalar time
    z_ref, K_ref, Vf_ref,            # z (TN,D), K (TN,D), V flattened (TN,D*D)
    Wcat_ref, bcat_ref, wtcat_ref,   # fused z-side linear [W1|Wq|Wk|Wv]
    W2_ref, b2_ref,                  # ode-net output linear
    Wq_ref, bq_ref,                  # weight_q (re-applied to dz)
    R_ref, Rt_ref, T_ref,            # constant repeat / tile matrices
    # outputs
    dz_ref, da_ref, dc_ref, dK_ref, dVf_ref,
):
    D = z_ref.shape[1]
    H = W2_ref.shape[0]

    t = t_ref[0, 0]
    z = z_ref[...]                                              # (TN, D)

    # ---- single fused MXU launch for all four z-side linears ---------------
    pre = (jnp.dot(z, Wcat_ref[...], preferred_element_type=jnp.float32)
           + bcat_ref[...] + t * wtcat_ref[...])                # (TN, H+3D)

    h  = jnp.tanh(pre[:, :H])                                   # ode-net hidden
    q  = jnp.exp(pre[:, H:H + D])                               # exp(weight_q(z))
    dK = jnp.exp(pre[:, H + D:H + 2 * D])                       # exp(weight_k(z))
    v  = pre[:, H + 2 * D:H + 3 * D]                            # weight_v(z)

    # ---- ode-net output; dq right after dz so Wq stays staged on the MXU ---
    dz = jnp.dot(h, W2_ref[...], preferred_element_type=jnp.float32) + b2_ref[...]
    dz_ref[...] = dz
    dq = q * (jnp.dot(dz, Wq_ref[...], preferred_element_type=jnp.float32)
              + bq_ref[...])

    dK_ref[...] = dK

    # ---- lane-dense outer product: dVf[n, i*D+j] = v[n,i] * dK[n,j] --------
    # v @ R repeats each v element D times; dK @ T tiles dK D times; both come
    # out of the MXU already (TN, D*D) lane-dense -> full unmasked stores.
    v_rep = jnp.dot(v, R_ref[...], preferred_element_type=jnp.float32)
    dK_t  = jnp.dot(dK, T_ref[...], preferred_element_type=jnp.float32)
    dVf_ref[...] = v_rep * dK_t

    # ---- a, da --------------------------------------------------------------
    a = jnp.sum(q * dK, axis=-1, keepdims=True)                 # (TN, 1)
    da_ref[...] = a + jnp.sum(dq * K_ref[...], axis=-1, keepdims=True)

    # ---- dc -----------------------------------------------------------------
    # First term simplified:   sum_j dV[n,i,j]*q[n,j] = v[n,i] * a[n]
    # Second term (flattened):  (Vf * (dq @ T)) @ R^T  ==  sum_j V[n,i,j]*dq[n,j]
    dq_t = jnp.dot(dq, T_ref[...], preferred_element_type=jnp.float32)
    dc_ref[...] = v * a + jnp.dot(Vf_ref[...] * dq_t, Rt_ref[...],
                                  preferred_element_type=jnp.float32)


def ode_func_causal_att(t, z, K, V, params):
    """Returns (dz, da, dc, dK, dV) matching the PyTorch forward."""
    N, D = z.shape
    H = params["W1"].shape[1]
    DD = D * D
    W = H + 3 * D

    # ---- host-side parameter packing (one-time / jit-hoistable) ------------
    Wcat = jnp.concatenate(
        [params["W1"], params["Wq"], params["Wk"], params["Wv"]], axis=1)   # (D, W)
    bcat = jnp.concatenate(
        [params["b1"], params["bq"], params["bk"], params["bv"]], axis=1)   # (1, W)
    wtcat = jnp.concatenate(
        [params["wt"], jnp.zeros((1, 3 * D), jnp.float32)], axis=1)         # (1, W)

    eye = jnp.eye(D, dtype=jnp.float32)
    R  = jnp.repeat(eye, D, axis=1)       # (D, D*D): R[i, i*D+j] = 1  (repeat)
    T  = jnp.tile(eye, (1, D))            # (D, D*D): T[j, i*D+j] = 1  (tile)
    Rt = R.T                              # (D*D, D)

    # ---- N tiling (pad rows to a multiple of the tile) ----------------------
    TN = 128 if N >= 128 else _round_up(N, 8)
    Np = _round_up(N, TN)
    Vf = V.reshape(N, DD)
    if Np != N:
        pad = ((0, Np - N), (0, 0))
        z_p, K_p, Vf_p = jnp.pad(z, pad), jnp.pad(K, pad), jnp.pad(Vf, pad)
    else:
        z_p, K_p, Vf_p = z, K, Vf

    t_arr = jnp.reshape(jnp.asarray(t, jnp.float32), (1, 1))

    row = lambda i: (i, 0)
    const = lambda i: (0, 0)

    out_shape = (
        jax.ShapeDtypeStruct((Np, D), jnp.float32),     # dz
        jax.ShapeDtypeStruct((Np, 1), jnp.float32),     # da
        jax.ShapeDtypeStruct((Np, D), jnp.float32),     # dc
        jax.ShapeDtypeStruct((Np, D), jnp.float32),     # dK
        jax.ShapeDtypeStruct((Np, DD), jnp.float32),    # dV (lane-dense, flattened)
    )

    in_specs = [
        pl.BlockSpec((1, 1), const, memory_space=pltpu.MemorySpace.SMEM),  # t
        pl.BlockSpec((TN, D), row),        # z
        pl.BlockSpec((TN, D), row),        # K
        pl.BlockSpec((TN, DD), row),       # V flattened
        pl.BlockSpec((D, W), const),       # Wcat
        pl.BlockSpec((1, W), const),       # bcat
        pl.BlockSpec((1, W), const),       # wtcat
        pl.BlockSpec((H, D), const),       # W2
        pl.BlockSpec((1, D), const),       # b2
        pl.BlockSpec((D, D), const),       # Wq
        pl.BlockSpec((1, D), const),       # bq
        pl.BlockSpec((D, DD), const),      # R
        pl.BlockSpec((DD, D), const),      # Rt
        pl.BlockSpec((D, DD), const),      # T
    ]
    out_specs = (
        pl.BlockSpec((TN, D), row),
        pl.BlockSpec((TN, 1), row),
        pl.BlockSpec((TN, D), row),
        pl.BlockSpec((TN, D), row),
        pl.BlockSpec((TN, DD), row),
    )

    dz, da, dc, dK, dVf = pl.pallas_call(
        _ode_causal_att_kernel,
        out_shape=out_shape,
        grid=(Np // TN,),
        in_specs=in_specs,
        out_specs=out_specs,
        compiler_params=pltpu.CompilerParams(
            dimension_semantics=("parallel",),       # v7x: shard rows over 2 TCs
            vmem_limit_bytes=32 * 1024 * 1024,       # explicit; fits all gens
        ),
    )(t_arr, z_p, K_p, Vf_p,
      Wcat, bcat, wtcat,
      params["W2"], params["b2"],
      params["Wq"], params["bq"],
      R, Rt, T)

    dV = dVf[:N].reshape(N, D, D)
    return dz[:N], da[:N], dc[:N], dK[:N], dV


def _reference(t, z, K, V, p):
    """Pure-JAX reference mirroring the PyTorch forward semantics (unsimplified)."""
    h = jnp.tanh(z @ p["W1"] + p["b1"] + t * p["wt"])
    dz = h @ p["W2"] + p["b2"]
    dK = jnp.exp(z @ p["Wk"] + p["bk"])
    v = z @ p["Wv"] + p["bv"]
    dV = jnp.einsum("ni,nj->nij", v, dK)
    q = jnp.exp(z @ p["Wq"] + p["bq"])
    a = jnp.sum(q * dK, axis=-1, keepdims=True)
    dq = q * (dz @ p["Wq"] + p["bq"])
    da = a + jnp.sum(dq * K, axis=-1, keepdims=True)
    dc = jnp.einsum("nij,nj->ni", dV, q) + jnp.einsum("nij,nj->ni", V, dq)
    return dz, da, dc, dK, dV


if __name__ == "__main__":
    N, D, H = 8, 32, 64   # batch rows, latent_dim, ode-net hidden
    key = jax.random.PRNGKey(0)
    ks = jax.random.split(key, 16)

    # deterministic synthetic states (z, a, c, K, V) — only z, K, V are read
    z = jax.random.normal(ks[0], (N, D), jnp.float32) * 0.5
    K = jax.random.normal(ks[1], (N, D), jnp.float32) * 0.5
    V = jax.random.normal(ks[2], (N, D, D), jnp.float32) * 0.5
    t = jnp.float32(0.5)

    # deterministic synthetic parameters.  PyTorch nn.Linear stores (out,in);
    # weights are generated directly in (in,out) layout so the kernel computes
    # x @ W + b (same math).
    s = 0.1
    params = {
        "W1": jax.random.normal(ks[3], (D, H), jnp.float32) * s,
        "b1": jax.random.normal(ks[4], (1, H), jnp.float32) * s,
        "wt": jax.random.normal(ks[5], (1, H), jnp.float32) * s,   # concat-layer time column
        "W2": jax.random.normal(ks[6], (H, D), jnp.float32) * s,
        "b2": jax.random.normal(ks[7], (1, D), jnp.float32) * s,
        "Wq": jax.random.normal(ks[8], (D, D), jnp.float32) * s,
        "bq": jax.random.normal(ks[9], (1, D), jnp.float32) * s,
        "Wk": jax.random.normal(ks[10], (D, D), jnp.float32) * s,
        "bk": jax.random.normal(ks[11], (1, D), jnp.float32) * s,
        "Wv": jax.random.normal(ks[12], (D, D), jnp.float32) * s,
        "bv": jax.random.normal(ks[13], (1, D), jnp.float32) * s,
    }

    out = ode_func_causal_att(t, z, K, V, params)
    out = jax.block_until_ready(out)

    ref = _reference(t, z, K, V, params)
    for o, r in zip(out, ref):
        assert o.shape == r.shape, (o.shape, r.shape)
        assert jnp.max(jnp.abs(o - r)) < 1e-4, float(jnp.max(jnp.abs(o - r)))

    print("KERNEL_OK")
</pallas_src>

<mosaic_0001>
module attributes {stable_mosaic.version = 11 : i64} {
  func.func @_ode_causal_att_kernel(%arg0: i32, %arg1: memref<1x1xf32, #tpu.memory_space<smem>>, %arg2: memref<8x32xf32, #tpu.memory_space<vmem>>, %arg3: memref<8x32xf32, #tpu.memory_space<vmem>>, %arg4: memref<8x1024xf32, #tpu.memory_space<vmem>>, %arg5: memref<32x160xf32, #tpu.memory_space<vmem>>, %arg6: memref<1x160xf32, #tpu.memory_space<vmem>>, %arg7: memref<1x160xf32, #tpu.memory_space<vmem>>, %arg8: memref<64x32xf32, #tpu.memory_space<vmem>>, %arg9: memref<1x32xf32, #tpu.memory_space<vmem>>, %arg10: memref<32x32xf32, #tpu.memory_space<vmem>>, %arg11: memref<1x32xf32, #tpu.memory_space<vmem>>, %arg12: memref<32x1024xf32, #tpu.memory_space<vmem>>, %arg13: memref<1024x32xf32, #tpu.memory_space<vmem>>, %arg14: memref<32x1024xf32, #tpu.memory_space<vmem>>, %arg15: memref<8x32xf32, #tpu.memory_space<vmem>>, %arg16: memref<8x1xf32, #tpu.memory_space<vmem>>, %arg17: memref<8x32xf32, #tpu.memory_space<vmem>>, %arg18: memref<8x32xf32, #tpu.memory_space<vmem>>, %arg19: memref<8x1024xf32, #tpu.memory_space<vmem>>) attributes {dimension_semantics = [#tpu.dimension_semantics<parallel>], iteration_bounds = array<i64: 1>, scalar_prefetch = 0 : i64, scratch_operands = 0 : i64, tpu.core_type = #tpu.core_type<tc>, window_params = [{transform_indices = @transform_0, window_bounds = array<i64: 1, 1>}, {transform_indices = @transform_1, window_bounds = array<i64: 8, 32>}, {transform_indices = @transform_2, window_bounds = array<i64: 8, 32>}, {transform_indices = @transform_3, window_bounds = array<i64: 8, 1024>}, {pipeline_mode = #tpu.pipeline_mode<synchronous>, transform_indices = @transform_4, window_bounds = array<i64: 32, 160>}, {pipeline_mode = #tpu.pipeline_mode<synchronous>, transform_indices = @transform_5, window_bounds = array<i64: 1, 160>}, {pipeline_mode = #tpu.pipeline_mode<synchronous>, transform_indices = @transform_6, window_bounds = array<i64: 1, 160>}, {pipeline_mode = #tpu.pipeline_mode<synchronous>, transform_indices = @transform_7, window_bounds = array<i64: 64, 32>}, {pipeline_mode = #tpu.pipeline_mode<synchronous>, transform_indices = @transform_8, window_bounds = array<i64: 1, 32>}, {pipeline_mode = #tpu.pipeline_mode<synchronous>, transform_indices = @transform_9, window_bounds = array<i64: 32, 32>}, {pipeline_mode = #tpu.pipeline_mode<synchronous>, transform_indices = @transform_10, window_bounds = array<i64: 1, 32>}, {pipeline_mode = #tpu.pipeline_mode<synchronous>, transform_indices = @transform_11, window_bounds = array<i64: 32, 1024>}, {pipeline_mode = #tpu.pipeline_mode<synchronous>, transform_indices = @transform_12, window_bounds = array<i64: 1024, 32>}, {pipeline_mode = #tpu.pipeline_mode<synchronous>, transform_indices = @transform_13, window_bounds = array<i64: 32, 1024>}, {transform_indices = @transform_14, window_bounds = array<i64: 8, 32>}, {transform_indices = @transform_15, window_bounds = array<i64: 8, 1>}, {transform_indices = @transform_16, window_bounds = array<i64: 8, 32>}, {transform_indices = @transform_17, window_bounds = array<i64: 8, 32>}, {transform_indices = @transform_18, window_bounds = array<i64: 8, 1024>}]} {
    %c0 = arith.constant 0 : index
    %c0_0 = arith.constant 0 : index
    %0 = memref.load %arg1[%c0, %c0_0] : memref<1x1xf32, #tpu.memory_space<smem>>
    %c0_1 = arith.constant 0 : index
    %c0_2 = arith.constant 0 : index
    %1 = vector.load %arg2[%c0_1, %c0_2] : memref<8x32xf32, #tpu.memory_space<vmem>>, vector<8x32xf32>
    %c0_3 = arith.constant 0 : index
    %c0_4 = arith.constant 0 : index
    %2 = vector.load %arg5[%c0_3, %c0_4] : memref<32x160xf32, #tpu.memory_space<vmem>>, vector<32x160xf32>
    %cst = arith.constant dense<0.000000e+00> : vector<8x160xf32>
    %3 = tpu.matmul %1, %2, %cst {dimension_numbers = #tpu.dot_dimension_numbers<[1], [0], [0], [1], [0, 0, 1, 1], [], []>} : vector<8x32xf32>, vector<32x160xf32>, vector<8x160xf32> -> vector<8x160xf32>
    %c0_5 = arith.constant 0 : index
    %c0_6 = arith.constant 0 : index
    %4 = vector.load %arg6[%c0_5, %c0_6] : memref<1x160xf32, #tpu.memory_space<vmem>>, vector<1x160xf32>
    %5 = vector.broadcast %4 : vector<1x160xf32> to vector<8x160xf32>
    %6 = arith.addf %3, %5 : vector<8x160xf32>
    %c0_7 = arith.constant 0 : index
    %c0_8 = arith.constant 0 : index
    %7 = vector.load %arg7[%c0_7, %c0_8] : memref<1x160xf32, #tpu.memory_space<vmem>>, vector<1x160xf32>
    %8 = vector.broadcast %0 : f32 to vector<1x160xf32>
    %9 = arith.mulf %8, %7 : vector<1x160xf32>
    %10 = vector.broadcast %9 : vector<1x160xf32> to vector<8x160xf32>
    %11 = arith.addf %6, %10 : vector<8x160xf32>
    %12 = vector.extract_strided_slice %11 {offsets = [0, 0], sizes = [8, 64], strides = [1, 1]} : vector<8x160xf32> to vector<8x64xf32>
    %13 = math.tanh %12 : vector<8x64xf32>
    %14 = vector.extract_strided_slice %11 {offsets = [0, 64], sizes = [8, 32], strides = [1, 1]} : vector<8x160xf32> to vector<8x32xf32>
    %15 = math.exp %14 : vector<8x32xf32>
    %16 = vector.extract_strided_slice %11 {offsets = [0, 96], sizes = [8, 32], strides = [1, 1]} : vector<8x160xf32> to vector<8x32xf32>
    %17 = math.exp %16 : vector<8x32xf32>
    %18 = vector.extract_strided_slice %11 {offsets = [0, 128], sizes = [8, 32], strides = [1, 1]} : vector<8x160xf32> to vector<8x32xf32>
    %c0_9 = arith.constant 0 : index
    %c0_10 = arith.constant 0 : index
    %19 = vector.load %arg8[%c0_9, %c0_10] : memref<64x32xf32, #tpu.memory_space<vmem>>, vector<64x32xf32>
    %cst_11 = arith.constant dense<0.000000e+00> : vector<8x32xf32>
    %20 = tpu.matmul %13, %19, %cst_11 {dimension_numbers = #tpu.dot_dimension_numbers<[1], [0], [0], [1], [0, 0, 1, 1], [], []>} : vector<8x64xf32>, vector<64x32xf32>, vector<8x32xf32> -> vector<8x32xf32>
    %c0_12 = arith.constant 0 : index
    %c0_13 = arith.constant 0 : index
    %21 = vector.load %arg9[%c0_12, %c0_13] : memref<1x32xf32, #tpu.memory_space<vmem>>, vector<1x32xf32>
    %22 = vector.broadcast %21 : vector<1x32xf32> to vector<8x32xf32>
    %23 = arith.addf %20, %22 : vector<8x32xf32>
    %c0_14 = arith.constant 0 : index
    %c0_15 = arith.constant 0 : index
    %24 = vector.load %arg15[%c0_14, %c0_15] : memref<8x32xf32, #tpu.memory_space<vmem>>, vector<8x32xf32>
    tpu.vector_store %arg15[%c0_14, %c0_15], %23 {strides = array<i32>} : memref<8x32xf32, #tpu.memory_space<vmem>>, vector<8x32xf32>,
    %c0_16 = arith.constant 0 : index
    %c0_17 = arith.constant 0 : index
    %25 = vector.load %arg10[%c0_16, %c0_17] : memref<32x32xf32, #tpu.memory_space<vmem>>, vector<32x32xf32>
    %cst_18 = arith.constant dense<0.000000e+00> : vector<8x32xf32>
    %26 = tpu.matmul %23, %25, %cst_18 {dimension_numbers = #tpu.dot_dimension_numbers<[1], [0], [0], [1], [0, 0, 1, 1], [], []>} : vector<8x32xf32>, vector<32x32xf32>, vector<8x32xf32> -> vector<8x32xf32>
    %c0_19 = arith.constant 0 : index
    %c0_20 = arith.constant 0 : index
    %27 = vector.load %arg11[%c0_19, %c0_20] : memref<1x32xf32, #tpu.memory_space<vmem>>, vector<1x32xf32>
    %28 = vector.broadcast %27 : vector<1x32xf32> to vector<8x32xf32>
    %29 = arith.addf %26, %28 : vector<8x32xf32>
    %30 = arith.mulf %15, %29 : vector<8x32xf32>
    %c0_21 = arith.constant 0 : index
    %c0_22 = arith.constant 0 : index
    %31 = vector.load %arg18[%c0_21, %c0_22] : memref<8x32xf32, #tpu.memory_space<vmem>>, vector<8x32xf32>
    tpu.vector_store %arg18[%c0_21, %c0_22], %17 {strides = array<i32>} : memref<8x32xf32, #tpu.memory_space<vmem>>, vector<8x32xf32>,
    %c0_23 = arith.constant 0 : index
    %c0_24 = arith.constant 0 : index
    %32 = vector.load %arg12[%c0_23, %c0_24] : memref<32x1024xf32, #tpu.memory_space<vmem>>, vector<32x1024xf32>
    %cst_25 = arith.constant dense<0.000000e+00> : vector<8x1024xf32>
    %33 = tpu.matmul %18, %32, %cst_25 {dimension_numbers = #tpu.dot_dimension_numbers<[1], [0], [0], [1], [0, 0, 1, 1], [], []>} : vector<8x32xf32>, vector<32x1024xf32>, vector<8x1024xf32> -> vector<8x1024xf32>
    %c0_26 = arith.constant 0 : index
    %c0_27 = arith.constant 0 : index
    %34 = vector.load %arg14[%c0_26, %c0_27] : memref<32x1024xf32, #tpu.memory_space<vmem>>, vector<32x1024xf32>
    %cst_28 = arith.constant dense<0.000000e+00> : vector<8x1024xf32>
    %35 = tpu.matmul %17, %34, %cst_28 {dimension_numbers = #tpu.dot_dimension_numbers<[1], [0], [0], [1], [0, 0, 1, 1], [], []>} : vector<8x32xf32>, vector<32x1024xf32>, vector<8x1024xf32> -> vector<8x1024xf32>
    %36 = arith.mulf %33, %35 : vector<8x1024xf32>
    %c0_29 = arith.constant 0 : index
    %c0_30 = arith.constant 0 : index
    %37 = vector.load %arg19[%c0_29, %c0_30] : memref<8x1024xf32, #tpu.memory_space<vmem>>, vector<8x1024xf32>
    tpu.vector_store %arg19[%c0_29, %c0_30], %36 {strides = array<i32>} : memref<8x1024xf32, #tpu.memory_space<vmem>>, vector<8x1024xf32>,
    %38 = arith.mulf %15, %17 : vector<8x32xf32>
    %cst_31 = arith.constant dense<0.000000e+00> : vector<8xf32>
    %39 = vector.multi_reduction <add>, %38, %cst_31 [1] : vector<8x32xf32> to vector<8xf32>
    %40 = vector.shape_cast %39 : vector<8xf32> to vector<8x1xf32>
    %c0_32 = arith.constant 0 : index
    %c0_33 = arith.constant 0 : index
    %41 = vector.load %arg3[%c0_32, %c0_33] : memref<8x32xf32, #tpu.memory_space<vmem>>, vector<8x32xf32>
    %42 = arith.mulf %30, %41 : vector<8x32xf32>
    %cst_34 = arith.constant dense<0.000000e+00> : vector<8xf32>
    %43 = vector.multi_reduction <add>, %42, %cst_34 [1] : vector<8x32xf32> to vector<8xf32>
    %44 = vector.shape_cast %43 : vector<8xf32> to vector<8x1xf32>
    %45 = arith.addf %40, %44 : vector<8x1xf32>
    %c0_35 = arith.constant 0 : index
    %c0_36 = arith.constant 0 : index
    %46 = vector.load %arg16[%c0_35, %c0_36] : memref<8x1xf32, #tpu.memory_space<vmem>>, vector<8x1xf32>
    tpu.vector_store %arg16[%c0_35, %c0_36], %45 {strides = array<i32>} : memref<8x1xf32, #tpu.memory_space<vmem>>, vector<8x1xf32>,
    %c0_37 = arith.constant 0 : index
    %c0_38 = arith.constant 0 : index
    %47 = vector.load %arg14[%c0_37, %c0_38] : memref<32x1024xf32, #tpu.memory_space<vmem>>, vector<32x1024xf32>
    %cst_39 = arith.constant dense<0.000000e+00> : vector<8x1024xf32>
    %48 = tpu.matmul %30, %47, %cst_39 {dimension_numbers = #tpu.dot_dimension_numbers<[1], [0], [0], [1], [0, 0, 1, 1], [], []>} : vector<8x32xf32>, vector<32x1024xf32>, vector<8x1024xf32> -> vector<8x1024xf32>
    %49 = vector.broadcast %40 : vector<8x1xf32> to vector<8x32xf32>
    %50 = arith.mulf %18, %49 : vector<8x32xf32>
    %c0_40 = arith.constant 0 : index
    %c0_41 = arith.constant 0 : index
    %51 = vector.load %arg4[%c0_40, %c0_41] : memref<8x1024xf32, #tpu.memory_space<vmem>>, vector<8x1024xf32>
    %52 = arith.mulf %51, %48 : vector<8x1024xf32>
    %c0_42 = arith.constant 0 : index
    %c0_43 = arith.constant 0 : index
    %53 = vector.load %arg13[%c0_42, %c0_43] : memref<1024x32xf32, #tpu.memory_space<vmem>>, vector<1024x32xf32>
    %cst_44 = arith.constant dense<0.000000e+00> : vector<8x32xf32>
    %54 = tpu.matmul %52, %53, %cst_44 {dimension_numbers = #tpu.dot_dimension_numbers<[1], [0], [0], [1], [0, 0, 1, 1], [], []>} : vector<8x1024xf32>, vector<1024x32xf32>, vector<8x32xf32> -> vector<8x32xf32>
    %55 = arith.addf %50, %54 : vector<8x32xf32>
    %c0_45 = arith.constant 0 : index
    %c0_46 = arith.constant 0 : index
    %56 = vector.load %arg17[%c0_45, %c0_46] : memref<8x32xf32, #tpu.memory_space<vmem>>, vector<8x32xf32>
    tpu.vector_store %arg17[%c0_45, %c0_46], %55 {strides = array<i32>} : memref<8x32xf32, #tpu.memory_space<vmem>>, vector<8x32xf32>,
    return
  }
  func.func @transform_0(%arg0: i32) -> (i32, i32) {
    %c0_i32 = arith.constant 0 : i32
    %c0_i32_0 = arith.constant 0 : i32
    %c0_i32_1 = arith.constant 0 : i32
    return %c0_i32, %c0_i32_0 : i32, i32
  }
  func.func @transform_1(%arg0: i32) -> (i32, i32) {
    %c0_i32 = arith.constant 0 : i32
    %c0_i32_0 = arith.constant 0 : i32
    return %arg0, %c0_i32 : i32, i32
  }
  func.func @transform_2(%arg0: i32) -> (i32, i32) {
    %c0_i32 = arith.constant 0 : i32
    %c0_i32_0 = arith.constant 0 : i32
    return %arg0, %c0_i32 : i32, i32
  }
  func.func @transform_3(%arg0: i32) -> (i32, i32) {
    %c0_i32 = arith.constant 0 : i32
    %c0_i32_0 = arith.constant 0 : i32
    return %arg0, %c0_i32 : i32, i32
  }
  func.func @transform_4(%arg0: i32) -> (i32, i32) {
    %c0_i32 = arith.constant 0 : i32
    %c0_i32_0 = arith.constant 0 : i32
    %c0_i32_1 = arith.constant 0 : i32
    return %c0_i32, %c0_i32_0 : i32, i32
  }
  func.func @transform_5(%arg0: i32) -> (i32, i32) {
    %c0_i32 = arith.constant 0 : i32
    %c0_i32_0 = arith.constant 0 : i32
    %c0_i32_1 = arith.constant 0 : i32
    return %c0_i32, %c0_i32_0 : i32, i32
  }
  func.func @transform_6(%arg0: i32) -> (i32, i32) {
    %c0_i32 = arith.constant 0 : i32
    %c0_i32_0 = arith.constant 0 : i32
    %c0_i32_1 = arith.constant 0 : i32
    return %c0_i32, %c0_i32_0 : i32, i32
  }
  func.func @transform_7(%arg0: i32) -> (i32, i32) {
    %c0_i32 = arith.constant 0 : i32
    %c0_i32_0 = arith.constant 0 : i32
    %c0_i32_1 = arith.constant 0 : i32
    return %c0_i32, %c0_i32_0 : i32, i32
  }
  func.func @transform_8(%arg0: i32) -> (i32, i32) {
    %c0_i32 = arith.constant 0 : i32
    %c0_i32_0 = arith.constant 0 : i32
    %c0_i32_1 = arith.constant 0 : i32
    return %c0_i32, %c0_i32_0 : i32, i32
  }
  func.func @transform_9(%arg0: i32) -> (i32, i32) {
    %c0_i32 = arith.constant 0 : i32
    %c0_i32_0 = arith.constant 0 : i32
    %c0_i32_1 = arith.constant 0 : i32
    return %c0_i32, %c0_i32_0 : i32, i32
  }
  func.func @transform_10(%arg0: i32) -> (i32, i32) {
    %c0_i32 = arith.constant 0 : i32
    %c0_i32_0 = arith.constant 0 : i32
    %c0_i32_1 = arith.constant 0 : i32
    return %c0_i32, %c0_i32_0 : i32, i32
  }
  func.func @transform_11(%arg0: i32) -> (i32, i32) {
    %c0_i32 = arith.constant 0 : i32
    %c0_i32_0 = arith.constant 0 : i32
    %c0_i32_1 = arith.constant 0 : i32
    return %c0_i32, %c0_i32_0 : i32, i32
  }
  func.func @transform_12(%arg0: i32) -> (i32, i32) {
    %c0_i32 = arith.constant 0 : i32
    %c0_i32_0 = arith.constant 0 : i32
    %c0_i32_1 = arith.constant 0 : i32
    return %c0_i32, %c0_i32_0 : i32, i32
  }
  func.func @transform_13(%arg0: i32) -> (i32, i32) {
    %c0_i32 = arith.constant 0 : i32
    %c0_i32_0 = arith.constant 0 : i32
    %c0_i32_1 = arith.constant 0 : i32
    return %c0_i32, %c0_i32_0 : i32, i32
  }
  func.func @transform_14(%arg0: i32) -> (i32, i32) {
    %c0_i32 = arith.constant 0 : i32
    %c0_i32_0 = arith.constant 0 : i32
    return %arg0, %c0_i32 : i32, i32
  }
  func.func @transform_15(%arg0: i32) -> (i32, i32) {
    %c0_i32 = arith.constant 0 : i32
    %c0_i32_0 = arith.constant 0 : i32
    return %arg0, %c0_i32 : i32, i32
  }
  func.func @transform_16(%arg0: i32) -> (i32, i32) {
    %c0_i32 = arith.constant 0 : i32
    %c0_i32_0 = arith.constant 0 : i32
    return %arg0, %c0_i32 : i32, i32
  }
  func.func @transform_17(%arg0: i32) -> (i32, i32) {
    %c0_i32 = arith.constant 0 : i32
    %c0_i32_0 = arith.constant 0 : i32
    return %arg0, %c0_i32 : i32, i32
  }
  func.func @transform_18(%arg0: i32) -> (i32, i32) {
    %c0_i32 = arith.constant 0 : i32
    %c0_i32_0 = arith.constant 0 : i32
    return %arg0, %c0_i32 : i32, i32
  }
}

</mosaic_0001>

<llo_original>
// kernel: tpu_custom_call.1
$region0: #{tpu_custom_call.1}
  #allocation0 [shape = 'u32[]', space=smem, size = 0x4, offset = 0x4, fixed_abs, tag = 'smem constant byte address 0x4 - core index']
  #allocation1 [shape = 'u32[144,128]{1,0:T(1,128)}', space=vmem, size = 0x12000, scoped, tag = 'internal scratch']
  #allocation2 [shape = 'f32[1,1]{1,0:T(1,128)S(6)}', space=smem, size = 0x200, scoped, tag = 'scoped memory for tpu_custom_call.1']
  %s0 = inlined_call_operand.<no memory space> [shape: f32[1,1], index: 0, kind: input, shape index: {}]
  %s1 = inlined_call_operand.vmem [shape: f32[8,32], index: 1, kind: input, shape index: {}]
  %s2 = inlined_call_operand.vmem [shape: f32[8,32], index: 2, kind: input, shape index: {}]
  %s3 = inlined_call_operand.vmem [shape: f32[8,1024], index: 3, kind: input, shape index: {}]
  %s4 = inlined_call_operand.vmem [shape: f32[32,160], index: 4, kind: input, shape index: {}]
  %s5 = inlined_call_operand.vmem [shape: f32[1,160], index: 5, kind: input, shape index: {}]
  %s6 = inlined_call_operand.vmem [shape: f32[1,160], index: 6, kind: input, shape index: {}]
  %s7 = inlined_call_operand.vmem [shape: f32[64,32], index: 7, kind: input, shape index: {}]
  %s8 = inlined_call_operand.vmem [shape: f32[1,32], index: 8, kind: input, shape index: {}]
  %s9 = inlined_call_operand.vmem [shape: f32[32,32], index: 9, kind: input, shape index: {}]
  %s10 = inlined_call_operand.vmem [shape: f32[1,32], index: 10, kind: input, shape index: {}]
  %s11 = inlined_call_operand.vmem [shape: f32[32,1024], index: 11, kind: input, shape index: {}]
  %s12 = inlined_call_operand.vmem [shape: f32[1024,32], index: 12, kind: input, shape index: {}]
  %s13 = inlined_call_operand.vmem [shape: f32[32,1024], index: 13, kind: input, shape index: {}]
  %s14 = inlined_call_operand.hbm [shape: f32[8,32], index: 14, kind: output, shape index: {0}]
  %s15 = inlined_call_operand.vmem [shape: f32[8,1], index: 15, kind: output, shape index: {1}]
  %s16 = inlined_call_operand.hbm [shape: f32[8,32], index: 16, kind: output, shape index: {2}]
  %s17 = inlined_call_operand.hbm [shape: f32[8,32], index: 17, kind: output, shape index: {3}]
  %s18 = inlined_call_operand.hbm [shape: f32[8,1024], index: 18, kind: output, shape index: {4}]
  %19 = xla_tuple %s14, %s15, %s16, %s17, %s18
  %s20 = sld [smem:[#allocation0]]
  $region98: #{tpu_custom_call.1} parent=0
    _
  %s22 = ssub.s32 1, %s20
  %s23 = scalar_select 0, %s22, %s20
  %24 = sst [smem:[#allocation2]] %s0
  $region1: #{tpu_custom_call.1} parent=0
    #allocation3 [shape = 'u8[4096]{0}', space=vmem, size = 0x1000, scoped, tag = 'output window, operand 0, single buffered']
    #allocation4 [shape = 's32[1]{0}', space=sflag, size = 0x4, scoped, tag = 'scoped memory for tpu_custom_call.1']
    #allocation5 [shape = 'u8[4096]{0}', space=vmem, size = 0x1000, scoped, tag = 'output window, operand 2, single buffered']
    #allocation6 [shape = 's32[1]{0}', space=sflag, size = 0x4, scoped, tag = 'scoped memory for tpu_custom_call.1']
    #allocation7 [shape = 'u8[4096]{0}', space=vmem, size = 0x1000, scoped, tag = 'output window, operand 3, single buffered']
    #allocation8 [shape = 'u8[32768]{0}', space=vmem, size = 0x8000, scoped, tag = 'output window, operand 4, single buffered']
    #allocation9 [shape = 's32[1]{0}', space=sflag, size = 0x4, scoped, tag = 'scoped memory for tpu_custom_call.1']
    %25 = vsyncpa [#allocation4], 0
    %26 = vsyncpa [#allocation6], 0
    %27 = vsyncpa [#allocation9], 0
    // Predicated region
    $region2: #{tpu_custom_call.1} parent=1 // pred_check
      _
    $region3: #{tpu_custom_call.1} parent=1 // pred_check_branch
      %29 = sbr.rel (0) target = $region5
    $region4: #{tpu_custom_call.1} parent=1 // pred_region
      _
    $region5: #{tpu_custom_call.1} parent=1 // pred_fallthru
      _
    // Predicated region
    $region6: #{tpu_custom_call.1} parent=1 // pred_check
      _
    $region7: #{tpu_custom_call.1} parent=1 // pred_check_branch
      %31 = sbr.rel (0) target = $region9
    $region8: #{tpu_custom_call.1} parent=1 // pred_region
      _
    $region9: #{tpu_custom_call.1} parent=1 // pred_fallthru
      _
    // Predicated region
    $region10: #{tpu_custom_call.1} parent=1 // pred_check
      _
    $region11: #{tpu_custom_call.1} parent=1 // pred_check_branch
      %33 = sbr.rel (0) target = $region13
    $region12: #{tpu_custom_call.1} parent=1 // pred_region
      _
    $region13: #{tpu_custom_call.1} parent=1 // pred_fallthru
      _
    // Predicated region
    $region14: #{tpu_custom_call.1} parent=1 // pred_check
      _
    $region15: #{tpu_custom_call.1} parent=1 // pred_check_branch
      %35 = sbr.rel (0) target = $region17
    $region16: #{tpu_custom_call.1} parent=1 // pred_region
      _
    $region17: #{tpu_custom_call.1} parent=1 // pred_fallthru
      _
    // Predicated region
    $region18: #{tpu_custom_call.1} parent=1 // pred_check
      _
    $region19: #{tpu_custom_call.1} parent=1 // pred_check_branch
      %37 = sbr.rel (0) target = $region21
    $region20: #{tpu_custom_call.1} parent=1 // pred_region
      _
    $region21: #{tpu_custom_call.1} parent=1 // pred_fallthru
      _
    // Predicated region
    $region22: #{tpu_custom_call.1} parent=1 // pred_check
      _
    $region23: #{tpu_custom_call.1} parent=1 // pred_check_branch
      %39 = sbr.rel (0) target = $region25
    $region24: #{tpu_custom_call.1} parent=1 // pred_region
      _
    $region25: #{tpu_custom_call.1} parent=1 // pred_fallthru
      _
    // Predicated region
    $region26: #{tpu_custom_call.1} parent=1 // pred_check
      _
    $region27: #{tpu_custom_call.1} parent=1 // pred_check_branch
      %41 = sbr.rel (0) target = $region29
    $region28: #{tpu_custom_call.1} parent=1 // pred_region
      _
    $region29: #{tpu_custom_call.1} parent=1 // pred_fallthru
      _
    // Predicated region
    $region30: #{tpu_custom_call.1} parent=1 // pred_check
      _
    $region31: #{tpu_custom_call.1} parent=1 // pred_check_branch
      %43 = sbr.rel (0) target = $region33
    $region32: #{tpu_custom_call.1} parent=1 // pred_region
      _
    $region33: #{tpu_custom_call.1} parent=1 // pred_fallthru
      _
    // Predicated region
    $region34: #{tpu_custom_call.1} parent=1 // pred_check
      _
    $region35: #{tpu_custom_call.1} parent=1 // pred_check_branch
      %45 = sbr.rel (0) target = $region37
    $region36: #{tpu_custom_call.1} parent=1 // pred_region
      _
    $region37: #{tpu_custom_call.1} parent=1 // pred_fallthru
      _
    // Predicated region
    $region38: #{tpu_custom_call.1} parent=1 // pred_check
      _
    $region39: #{tpu_custom_call.1} parent=1 // pred_check_branch
      %47 = sbr.rel (0) target = $region41
    $region40: #{tpu_custom_call.1} parent=1 // pred_region
      _
    $region41: #{tpu_custom_call.1} parent=1 // pred_fallthru
      _
    // Predicated region
    $region42: #{tpu_custom_call.1} parent=1 // pred_check
      _
    $region43: #{tpu_custom_call.1} parent=1 // pred_check_branch
      %49 = sbr.rel (0) target = $region45
    $region44: #{tpu_custom_call.1} parent=1 // pred_region
      _
    $region45: #{tpu_custom_call.1} parent=1 // pred_fallthru
      _
    // Predicated region
    $region46: #{tpu_custom_call.1} parent=1 // pred_check
      _
    $region47: #{tpu_custom_call.1} parent=1 // pred_check_branch
      %51 = sbr.rel (0) target = $region49
    $region48: #{tpu_custom_call.1} parent=1 // pred_region
      _
    $region49: #{tpu_custom_call.1} parent=1 // pred_fallthru
      _
    // Predicated region
    $region50: #{tpu_custom_call.1} parent=1 // pred_check
      _
    $region51: #{tpu_custom_call.1} parent=1 // pred_check_branch
      %53 = sbr.rel (0) target = $region53
    $region52: #{tpu_custom_call.1} parent=1 // pred_region
      _
    $region53: #{tpu_custom_call.1} parent=1 // pred_fallthru
      _
    // Predicated region
    $region54: #{tpu_custom_call.1} parent=1 // pred_check
      _
    $region55: #{tpu_custom_call.1} parent=1 // pred_check_branch
      %55 = sbr.rel (0) target = $region57
    $region56: #{tpu_custom_call.1} parent=1 // pred_region
      _
    $region57: #{tpu_custom_call.1} parent=1 // pred_fallthru
      _
    %s56 = sld [smem:[#allocation2]]
    %v57 = vld [vmem:[%s1] sm:$0xff]
    %v58 = vld [vmem:[%s4] sm:$0xff]
    %v59 = vld [vmem:[%s4 + $0x8] sm:$0xff]
    %v60 = vld [vmem:[%s4 + $0x10] sm:$0xff]
    %v61 = vld [vmem:[%s4 + $0x18] sm:$0xff]
    %v62 = vld [vmem:[%s4 + $0x20] sm:$0xff]
    %v63 = vld [vmem:[%s4 + $0x28] sm:$0xff]
    %v64 = vld [vmem:[%s4 + $0x30] sm:$0xff]
    %v65 = vld [vmem:[%s4 + $0x38] sm:$0xff]
    %v66 = vld [vmem:[%s5] sm:$0x3]
    %v68 = vlaneseq
    %v69 = vshrl.u32 %v68, 7
    %v70 = vsub.s32 0, %v69
    %v71 = vrot.slane %v66, %v70
    %v72 = vlaneseq
    %v73 = vshrl.u32 %v72, 7
    %v74 = vsub.s32 1, %v73
    %v75 = vrot.slane %v66, %v74
    %vm78 = vcmask 261120
    %v80 = vsel %vm78, %v57, 0
    %82 = vmatprep.subr.mxu0 %v59
    %83 = vmatpush1.msra.mxu0 %v58
    %84 = vmatprep.subr.mxu0 %v61
    %85 = vmatpush1.msra.mxu0 %v60
    %86 = vmatprep.subr.mxu0 %v63
    %87 = vmatpush1.msra.mxu0 %v62
    %88 = vmatprep.subr.mxu0 %v65
    %89 = vmatpush1.msra.mxu0 %v64
    %90 = vmatprep.subr.mxu0 0.0
    %91 = vmatpush1.msra.mxu0 0.0
    %92 = vmatprep.subr.mxu0 0.0
    %93 = vmatpush1.msra.mxu0 0.0
    %94 = vmatprep.subr.mxu0 0.0
    %95 = vmatpush1.msra.mxu0 0.0
    %96 = vmatprep.subr.mxu0 0.0
    %97 = vmatpush1.msra.mxu0 0.0
    %98 = vmatprep.subr.mxu0 0.0
    %99 = vmatpush1.msra.mxu0 0.0
    %100 = vmatprep.subr.mxu0 0.0
    %101 = vmatpush1.msra.mxu0 0.0
    %102 = vmatprep.subr.mxu0 0.0
    %103 = vmatpush1.msra.mxu0 0.0
    %104 = vmatprep.subr.mxu0 0.0
    %105 = vmatpush1.msra.mxu0 0.0
    %106 = vmatprep.subr.mxu0 0.0
    %107 = vmatpush1.msra.mxu0 0.0
    %108 = vmatprep.subr.mxu0 0.0
    %109 = vmatpush1.msra.mxu0 0.0
    %110 = vmatprep.subr.mxu0 0.0
    %111 = vmatpush1.msra.mxu0 0.0
    %112 = vmatprep.subr.mxu0 0.0
    %113 = vmatpush1.msra.mxu0 0.0
    %114 = vmatprep.subr.mxu0 0.0
    %115 = vmatpush1.msra.mxu0 0.0
    %116 = vmatprep.subr.mxu0 0.0
    %117 = vmatpush1.msra.mxu0 0.0
    %118 = vmatprep.subr.mxu0 0.0
    %119 = vmatpush1.msra.mxu0 0.0
    %120 = vmatprep.subr.mxu0 0.0
    %121 = vmatpush1.msra.mxu0 0.0
    %122 = vmatprep.subr.mxu0 0.0
    %123 = vmatpush1.msra.mxu0 0.0
    %124 = vmatprep.subr.mxu0 0.0
    %125 = vmatpush1.msra.mxu0 0.0
    %126 = vmatprep.subr.mxu0 0.0
    %127 = vmatpush1.msra.mxu0 0.0
    %128 = vmatprep.subr.mxu0 0.0
    %129 = vmatpush1.msra.mxu0 0.0
    %130 = vmatprep.subr.mxu0 0.0
    %131 = vmatpush1.msra.mxu0 0.0
    %132 = vmatprep.subr.mxu0 0.0
    %133 = vmatpush1.msra.mxu0 0.0
    %134 = vmatprep.subr.mxu0 0.0
    %135 = vmatpush1.msra.mxu0 0.0
    %136 = vmatprep.subr.mxu0 0.0
    %137 = vmatpush1.msra.mxu0 0.0
    %138 = vmatprep.subr.mxu0 0.0
    %139 = vmatpush1.msra.mxu0 0.0
    %140 = vmatprep.subr.mxu0 0.0
    %141 = vmatpush1.msra.mxu0 0.0
    %142 = vmatprep.subr.mxu0 0.0
    %143 = vmatpush1.msra.mxu0 0.0
    %144 = vmatprep.subr.mxu0 0.0
    %145 = vmatpush1.msra.mxu0 0.0
    %146 = vmatprep.mubr.f32.mxu0 0.0
    %147 = vmatmul.mubr.f32.gmra.mrb[0].mxu0 %v80
    %v148 = vpop.f32.mrb[0].mxu0
    %v149 = vadd.f32 %v71, %v148
    %v150 = vpop.f32.mrb[0].mxu0
    %v151 = vadd.f32 %v75, %v150
    %152 = vdwg.mxu0
    %v153 = vld [vmem:[%s6] sm:$0x3]
    %v154 = vstv %s56
    %v155 = vmul.f32 %v154, %v153
    %v157 = vlaneseq
    %v158 = vshrl.u32 %v157, 7
    %v159 = vsub.s32 0, %v158
    %v160 = vrot.slane %v155, %v159
    %v161 = vlaneseq
    %v162 = vshrl.u32 %v161, 7
    %v163 = vsub.s32 1, %v162
    %v164 = vrot.slane %v155, %v163
    %v167 = vadd.f32 %v149, %v160
    %v168 = vadd.f32 %v151, %v164
    %v169 = vtanh.pop %v167
    %v170 = vmul.f32 %v167, 1.442695
    %v171 = vpow.pop %v170
    %v172 = vld [vmem:[%s7] sm:$0xff]
    %v173 = vld [vmem:[%s7 + $0x8] sm:$0xff]
    %v174 = vld [vmem:[%s7 + $0x10] sm:$0xff]
    %v175 = vld [vmem:[%s7 + $0x18] sm:$0xff]
    %v176 = vld [vmem:[%s7 + $0x20] sm:$0xff]
    %v177 = vld [vmem:[%s7 + $0x28] sm:$0xff]
    %v178 = vld [vmem:[%s7 + $0x30] sm:$0xff]
    %v179 = vld [vmem:[%s7 + $0x38] sm:$0xff]
    %v180 = vld [vmem:[%s8] sm:$0x1]
    %v182 = vlaneseq
    %v183 = vshrl.u32 %v182, 7
    %v184 = vsub.s32 0, %v183
    %v185 = vrot.slane %v180, %v184
    %vm187 = vcmask 523264
    %v189 = vsel %vm187, %v169, 0
    %191 = vmatprep.subr.mxu0 0.0
    %192 = vmatpush1.msra.mxu0 %v172
    %193 = vmatprep.subr.mxu0 0.0
    %194 = vmatpush1.msra.mxu0 %v173
    %195 = vmatprep.subr.mxu0 0.0
    %196 = vmatpush1.msra.mxu0 %v174
    %197 = vmatprep.subr.mxu0 0.0
    %198 = vmatpush1.msra.mxu0 %v175
    %199 = vmatprep.subr.mxu0 0.0
    %200 = vmatpush1.msra.mxu0 %v176
    %201 = vmatprep.subr.mxu0 0.0
    %202 = vmatpush1.msra.mxu0 %v177
    %203 = vmatprep.subr.mxu0 0.0
    %204 = vmatpush1.msra.mxu0 %v178
    %205 = vmatprep.subr.mxu0 0.0
    %206 = vmatpush1.msra.mxu0 %v179
    %207 = vmatprep.subr.mxu0 0.0
    %208 = vmatpush1.msra.mxu0 0.0
    %209 = vmatprep.subr.mxu0 0.0
    %210 = vmatpush1.msra.mxu0 0.0
    %211 = vmatprep.subr.mxu0 0.0
    %212 = vmatpush1.msra.mxu0 0.0
    %213 = vmatprep.subr.mxu0 0.0
    %214 = vmatpush1.msra.mxu0 0.0
    %215 = vmatprep.subr.mxu0 0.0
    %216 = vmatpush1.msra.mxu0 0.0
    %217 = vmatprep.subr.mxu0 0.0
    %218 = vmatpush1.msra.mxu0 0.0
    %219 = vmatprep.subr.mxu0 0.0
    %220 = vmatpush1.msra.mxu0 0.0
    %221 = vmatprep.subr.mxu0 0.0
    %222 = vmatpush1.msra.mxu0 0.0
    %223 = vmatprep.subr.mxu0 0.0
    %224 = vmatpush1.msra.mxu0 0.0
    %225 = vmatprep.subr.mxu0 0.0
    %226 = vmatpush1.msra.mxu0 0.0
    %227 = vmatprep.subr.mxu0 0.0
    %228 = vmatpush1.msra.mxu0 0.0
    %229 = vmatprep.subr.mxu0 0.0
    %230 = vmatpush1.msra.mxu0 0.0
    %231 = vmatprep.subr.mxu0 0.0
    %232 = vmatpush1.msra.mxu0 0.0
    %233 = vmatprep.subr.mxu0 0.0
    %234 = vmatpush1.msra.mxu0 0.0
    %235 = vmatprep.subr.mxu0 0.0
    %236 = vmatpush1.msra.mxu0 0.0
    %237 = vmatprep.subr.mxu0 0.0
    %238 = vmatpush1.msra.mxu0 0.0
    %239 = vmatprep.subr.mxu0 0.0
    %240 = vmatpush1.msra.mxu0 0.0
    %241 = vmatprep.subr.mxu0 0.0
    %242 = vmatpush1.msra.mxu0 0.0
    %243 = vmatprep.subr.mxu0 0.0
    %244 = vmatpush1.msra.mxu0 0.0
    %245 = vmatprep.subr.mxu0 0.0
    %246 = vmatpush1.msra.mxu0 0.0
    %247 = vmatprep.subr.mxu0 0.0
    %248 = vmatpush1.msra.mxu0 0.0
    %249 = vmatprep.subr.mxu0 0.0
    %250 = vmatpush1.msra.mxu0 0.0
    %251 = vmatprep.subr.mxu0 0.0
    %252 = vmatpush1.msra.mxu0 0.0
    %253 = vmatprep.subr.mxu0 0.0
    %254 = vmatpush1.msra.mxu0 0.0
    %255 = vmatprep.mubr.f32.mxu0 0.0
    %256 = vmatmul.mubr.f32.gmra.mrb[0].mxu0 %v189
    %v257 = vpop.f32.mrb[0].mxu0
    %v258 = vadd.f32 %v185, %v257
    %v259 = vpop.f32.mrb[0].mxu0
    %260 = vdwg.mxu0
    %261 = vst.msk [vmem:[#allocation3] sm:$0xff] %vm78, %v258
    %v262 = vld [vmem:[%s9] sm:$0xff]
    %v263 = vld [vmem:[%s9 + $0x8] sm:$0xff]
    %v264 = vld [vmem:[%s9 + $0x10] sm:$0xff]
    %v265 = vld [vmem:[%s9 + $0x18] sm:$0xff]
    %v266 = vld [vmem:[%s10] sm:$0x1]
    %v268 = vlaneseq
    %v269 = vshrl.u32 %v268, 7
    %v270 = vsub.s32 0, %v269
    %v271 = vrot.slane %v266, %v270
    %v274 = vsel %vm78, %v258, 0
    %276 = vmatprep.subr.mxu0 0.0
    %277 = vmatpush1.msra.mxu0 %v262
    %278 = vmatprep.subr.mxu0 0.0
    %279 = vmatpush1.msra.mxu0 %v263
    %280 = vmatprep.subr.mxu0 0.0
    %281 = vmatpush1.msra.mxu0 %v264
    %282 = vmatprep.subr.mxu0 0.0
    %283 = vmatpush1.msra.mxu0 %v265
    %284 = vmatprep.subr.mxu0 0.0
    %285 = vmatpush1.msra.mxu0 0.0
    %286 = vmatprep.subr.mxu0 0.0
    %287 = vmatpush1.msra.mxu0 0.0
    %288 = vmatprep.subr.mxu0 0.0
    %289 = vmatpush1.msra.mxu0 0.0
    %290 = vmatprep.subr.mxu0 0.0
    %291 = vmatpush1.msra.mxu0 0.0
    %292 = vmatprep.subr.mxu0 0.0
    %293 = vmatpush1.msra.mxu0 0.0
    %294 = vmatprep.subr.mxu0 0.0
    %295 = vmatpush1.msra.mxu0 0.0
    %296 = vmatprep.subr.mxu0 0.0
    %297 = vmatpush1.msra.mxu0 0.0
    %298 = vmatprep.subr.mxu0 0.0
    %299 = vmatpush1.msra.mxu0 0.0
    %300 = vmatprep.subr.mxu0 0.0
    %301 = vmatpush1.msra.mxu0 0.0
    %302 = vmatprep.subr.mxu0 0.0
    %303 = vmatpush1.msra.mxu0 0.0
    %304 = vmatprep.subr.mxu0 0.0
    %305 = vmatpush1.msra.mxu0 0.0
    %306 = vmatprep.subr.mxu0 0.0
    %307 = vmatpush1.msra.mxu0 0.0
    %308 = vmatprep.subr.mxu0 0.0
    %309 = vmatpush1.msra.mxu0 0.0
    %310 = vmatprep.subr.mxu0 0.0
    %311 = vmatpush1.msra.mxu0 0.0
    %312 = vmatprep.subr.mxu0 0.0
    %313 = vmatpush1.msra.mxu0 0.0
    %314 = vmatprep.subr.mxu0 0.0
    %315 = vmatpush1.msra.mxu0 0.0
    %316 = vmatprep.subr.mxu0 0.0
    %317 = vmatpush1.msra.mxu0 0.0
    %318 = vmatprep.subr.mxu0 0.0
    %319 = vmatpush1.msra.mxu0 0.0
    %320 = vmatprep.subr.mxu0 0.0
    %321 = vmatpush1.msra.mxu0 0.0
    %322 = vmatprep.subr.mxu0 0.0
    %323 = vmatpush1.msra.mxu0 0.0
    %324 = vmatprep.subr.mxu0 0.0
    %325 = vmatpush1.msra.mxu0 0.0
    %326 = vmatprep.subr.mxu0 0.0
    %327 = vmatpush1.msra.mxu0 0.0
    %328 = vmatprep.subr.mxu0 0.0
    %329 = vmatpush1.msra.mxu0 0.0
    %330 = vmatprep.subr.mxu0 0.0
    %331 = vmatpush1.msra.mxu0 0.0
    %332 = vmatprep.subr.mxu0 0.0
    %333 = vmatpush1.msra.mxu0 0.0
    %334 = vmatprep.subr.mxu0 0.0
    %335 = vmatpush1.msra.mxu0 0.0
    %336 = vmatprep.subr.mxu0 0.0
    %337 = vmatpush1.msra.mxu0 0.0
    %338 = vmatprep.subr.mxu0 0.0
    %339 = vmatpush1.msra.mxu0 0.0
    %340 = vmatprep.mubr.f32.mxu0 0.0
    %341 = vmatmul.mubr.f32.gmra.mrb[0].mxu0 %v274
    %v342 = vpop.f32.mrb[0].mxu0
    %v343 = vadd.f32 %v271, %v342
    %v344 = vpop.f32.mrb[0].mxu0
    %345 = vdwg.mxu0
    %347 = vrot.lane.b32.xlu0 %v343, 64
    %v348 = vpop.permute.xlu0 %347
    %v350 = vmul.f32 %v171, %v348
    %352 = vrot.lane.b32.xlu0 %v171, 32
    %v353 = vpop.permute.xlu0 %352
    %355 = vst.msk [vmem:[#allocation7] sm:$0xff] %vm78, %v353
    %v356 = vld [vmem:[%s11] sm:$0xff]
    %v357 = vld [vmem:[%s11 + $0x8] sm:$0xff]
    %v358 = vld [vmem:[%s11 + $0x10] sm:$0xff]
    %v359 = vld [vmem:[%s11 + $0x18] sm:$0xff]
    %v360 = vld [vmem:[%s11 + $0x20] sm:$0xff]
    %v361 = vld [vmem:[%s11 + $0x28] sm:$0xff]
    %v362 = vld [vmem:[%s11 + $0x30] sm:$0xff]
    %v363 = vld [vmem:[%s11 + $0x38] sm:$0xff]
    %v364 = vld [vmem:[%s11 + $0x40] sm:$0xff]
    %v365 = vld [vmem:[%s11 + $0x48] sm:$0xff]
    %v366 = vld [vmem:[%s11 + $0x50] sm:$0xff]
    %v367 = vld [vmem:[%s11 + $0x58] sm:$0xff]
    %v368 = vld [vmem:[%s11 + $0x60] sm:$0xff]
    %v369 = vld [vmem:[%s11 + $0x68] sm:$0xff]
    %v370 = vld [vmem:[%s11 + $0x70] sm:$0xff]
    %v371 = vld [vmem:[%s11 + $0x78] sm:$0xff]
    %v372 = vld [vmem:[%s11 + $0x80] sm:$0xff]
    %v373 = vld [vmem:[%s11 + $0x88] sm:$0xff]
    %v374 = vld [vmem:[%s11 + $0x90] sm:$0xff]
    %v375 = vld [vmem:[%s11 + $0x98] sm:$0xff]
    %v376 = vld [vmem:[%s11 + $0xa0] sm:$0xff]
    %v377 = vld [vmem:[%s11 + $0xa8] sm:$0xff]
    %v378 = vld [vmem:[%s11 + $0xb0] sm:$0xff]
    %v379 = vld [vmem:[%s11 + $0xb8] sm:$0xff]
    %v380 = vld [vmem:[%s11 + $0xc0] sm:$0xff]
    %v381 = vld [vmem:[%s11 + $0xc8] sm:$0xff]
    %v382 = vld [vmem:[%s11 + $0xd0] sm:$0xff]
    %v383 = vld [vmem:[%s11 + $0xd8] sm:$0xff]
    %v384 = vld [vmem:[%s11 + $0xe0] sm:$0xff]
    %v385 = vld [vmem:[%s11 + $0xe8] sm:$0xff]
    %v386 = vld [vmem:[%s11 + $0xf0] sm:$0xff]
    %v387 = vld [vmem:[%s11 + $0xf8] sm:$0xff]
    %v389 = vsel %vm78, %v168, 0
    %391 = vmatprep.subr.mxu0 %v357
    %392 = vmatpush1.msra.mxu0 %v356
    %393 = vmatprep.subr.mxu0 %v365
    %394 = vmatpush1.msra.mxu0 %v364
    %395 = vmatprep.subr.mxu0 %v373
    %396 = vmatpush1.msra.mxu0 %v372
    %397 = vmatprep.subr.mxu0 %v381
    %398 = vmatpush1.msra.mxu0 %v380
    %399 = vmatprep.subr.mxu0 0.0
    %400 = vmatpush1.msra.mxu0 0.0
    %401 = vmatprep.subr.mxu0 0.0
    %402 = vmatpush1.msra.mxu0 0.0
    %403 = vmatprep.subr.mxu0 0.0
    %404 = vmatpush1.msra.mxu0 0.0
    %405 = vmatprep.subr.mxu0 0.0
    %406 = vmatpush1.msra.mxu0 0.0
    %407 = vmatprep.subr.mxu0 0.0
    %408 = vmatpush1.msra.mxu0 0.0
    %409 = vmatprep.subr.mxu0 0.0
    %410 = vmatpush1.msra.mxu0 0.0
    %411 = vmatprep.subr.mxu0 0.0
    %412 = vmatpush1.msra.mxu0 0.0
    %413 = vmatprep.subr.mxu0 0.0
    %414 = vmatpush1.msra.mxu0 0.0
    %415 = vmatprep.subr.mxu0 0.0
    %416 = vmatpush1.msra.mxu0 0.0
    %417 = vmatprep.subr.mxu0 0.0
    %418 = vmatpush1.msra.mxu0 0.0
    %419 = vmatprep.subr.mxu0 0.0
    %420 = vmatpush1.msra.mxu0 0.0
    %421 = vmatprep.subr.mxu0 0.0
    %422 = vmatpush1.msra.mxu0 0.0
    %423 = vmatprep.subr.mxu0 0.0
    %424 = vmatpush1.msra.mxu0 0.0
    %425 = vmatprep.subr.mxu0 0.0
    %426 = vmatpush1.msra.mxu0 0.0
    %427 = vmatprep.subr.mxu0 0.0
    %428 = vmatpush1.msra.mxu0 0.0
    %429 = vmatprep.subr.mxu0 0.0
    %430 = vmatpush1.msra.mxu0 0.0
    %431 = vmatprep.subr.mxu0 0.0
    %432 = vmatpush1.msra.mxu0 0.0
    %433 = vmatprep.subr.mxu0 0.0
    %434 = vmatpush1.msra.mxu0 0.0
    %435 = vmatprep.subr.mxu0 0.0
    %436 = vmatpush1.msra.mxu0 0.0
    %437 = vmatprep.subr.mxu0 0.0
    %438 = vmatpush1.msra.mxu0 0.0
    %439 = vmatprep.subr.mxu0 0.0
    %440 = vmatpush1.msra.mxu0 0.0
    %441 = vmatprep.subr.mxu0 0.0
    %442 = vmatpush1.msra.mxu0 0.0
    %443 = vmatprep.subr.mxu0 0.0
    %444 = vmatpush1.msra.mxu0 0.0
    %445 = vmatprep.subr.mxu0 0.0
    %446 = vmatpush1.msra.mxu0 0.0
    %447 = vmatprep.subr.mxu0 0.0
    %448 = vmatpush1.msra.mxu0 0.0
    %449 = vmatprep.subr.mxu0 0.0
    %450 = vmatpush1.msra.mxu0 0.0
    %451 = vmatprep.subr.mxu0 0.0
    %452 = vmatpush1.msra.mxu0 0.0
    %453 = vmatprep.subr.mxu0 0.0
    %454 = vmatpush1.msra.mxu0 0.0
    %455 = vmatprep.mubr.f32.mxu0 0.0
    %456 = vmatmul.mubr.f32.gmra.mrb[0].mxu0 %v389
    %v457 = vpop.f32.mrb[0].mxu0
    %v458 = vadd.f32 0.0, %v457
    %v459 = vpop.f32.mrb[0].mxu0
    %v460 = vadd.f32 0.0, %v459
    %461 = vdwg.mxu0
    %462 = vmatprep.subr.mxu0 %v359
    %463 = vmatpush1.msra.mxu0 %v358
    %464 = vmatprep.subr.mxu0 %v367
    %465 = vmatpush1.msra.mxu0 %v366
    %466 = vmatprep.subr.mxu0 %v375
    %467 = vmatpush1.msra.mxu0 %v374
    %468 = vmatprep.subr.mxu0 %v383
    %469 = vmatpush1.msra.mxu0 %v382
    %470 = vmatprep.subr.mxu0 0.0
    %471 = vmatpush1.msra.mxu0 0.0
    %472 = vmatprep.subr.mxu0 0.0
    %473 = vmatpush1.msra.mxu0 0.0
    %474 = vmatprep.subr.mxu0 0.0
    %475 = vmatpush1.msra.mxu0 0.0
    %476 = vmatprep.subr.mxu0 0.0
    %477 = vmatpush1.msra.mxu0 0.0
    %478 = vmatprep.subr.mxu0 0.0
    %479 = vmatpush1.msra.mxu0 0.0
    %480 = vmatprep.subr.mxu0 0.0
    %481 = vmatpush1.msra.mxu0 0.0
    %482 = vmatprep.subr.mxu0 0.0
    %483 = vmatpush1.msra.mxu0 0.0
    %484 = vmatprep.subr.mxu0 0.0
    %485 = vmatpush1.msra.mxu0 0.0
    %486 = vmatprep.subr.mxu0 0.0
    %487 = vmatpush1.msra.mxu0 0.0
    %488 = vmatprep.subr.mxu0 0.0
    %489 = vmatpush1.msra.mxu0 0.0
    %490 = vmatprep.subr.mxu0 0.0
    %491 = vmatpush1.msra.mxu0 0.0
    %492 = vmatprep.subr.mxu0 0.0
    %493 = vmatpush1.msra.mxu0 0.0
    %494 = vmatprep.subr.mxu0 0.0
    %495 = vmatpush1.msra.mxu0 0.0
    %496 = vmatprep.subr.mxu0 0.0
    %497 = vmatpush1.msra.mxu0 0.0
    %498 = vmatprep.subr.mxu0 0.0
    %499 = vmatpush1.msra.mxu0 0.0
    %500 = vmatprep.subr.mxu0 0.0
    %501 = vmatpush1.msra.mxu0 0.0
    %502 = vmatprep.subr.mxu0 0.0
    %503 = vmatpush1.msra.mxu0 0.0
    %504 = vmatprep.subr.mxu0 0.0
    %505 = vmatpush1.msra.mxu0 0.0
    %506 = vmatprep.subr.mxu0 0.0
    %507 = vmatpush1.msra.mxu0 0.0
    %508 = vmatprep.subr.mxu0 0.0
    %509 = vmatpush1.msra.mxu0 0.0
    %510 = vmatprep.subr.mxu0 0.0
    %511 = vmatpush1.msra.mxu0 0.0
    %512 = vmatprep.subr.mxu0 0.0
    %513 = vmatpush1.msra.mxu0 0.0
    %514 = vmatprep.subr.mxu0 0.0
    %515 = vmatpush1.msra.mxu0 0.0
    %516 = vmatprep.subr.mxu0 0.0
    %517 = vmatpush1.msra.mxu0 0.0
    %518 = vmatprep.subr.mxu0 0.0
    %519 = vmatpush1.msra.mxu0 0.0
    %520 = vmatprep.subr.mxu0 0.0
    %521 = vmatpush1.msra.mxu0 0.0
    %522 = vmatprep.subr.mxu0 0.0
    %523 = vmatpush1.msra.mxu0 0.0
    %524 = vmatprep.subr.mxu0 0.0
    %525 = vmatpush1.msra.mxu0 0.0
    %526 = vmatprep.mubr.f32.mxu0 0.0
    %527 = vmatmul.mubr.f32.gmra.mrb[0].mxu0 %v389
    %v528 = vpop.f32.mrb[0].mxu0
    %v529 = vadd.f32 0.0, %v528
    %v530 = vpop.f32.mrb[0].mxu0
    %v531 = vadd.f32 0.0, %v530
    %532 = vdwg.mxu0
    %533 = vmatprep.subr.mxu0 %v361
    %534 = vmatpush1.msra.mxu0 %v360
    %535 = vmatprep.subr.mxu0 %v369
    %536 = vmatpush1.msra.mxu0 %v368
    %537 = vmatprep.subr.mxu0 %v377
    %538 = vmatpush1.msra.mxu0 %v376
    %539 = vmatprep.subr.mxu0 %v385
    %540 = vmatpush1.msra.mxu0 %v384
    %541 = vmatprep.subr.mxu0 0.0
    %542 = vmatpush1.msra.mxu0 0.0
    %543 = vmatprep.subr.mxu0 0.0
    %544 = vmatpush1.msra.mxu0 0.0
    %545 = vmatprep.subr.mxu0 0.0
    %546 = vmatpush1.msra.mxu0 0.0
    %547 = vmatprep.subr.mxu0 0.0
    %548 = vmatpush1.msra.mxu0 0.0
    %549 = vmatprep.subr.mxu0 0.0
    %550 = vmatpush1.msra.mxu0 0.0
    %551 = vmatprep.subr.mxu0 0.0
    %552 = vmatpush1.msra.mxu0 0.0
    %553 = vmatprep.subr.mxu0 0.0
    %554 = vmatpush1.msra.mxu0 0.0
    %555 = vmatprep.subr.mxu0 0.0
    %556 = vmatpush1.msra.mxu0 0.0
    %557 = vmatprep.subr.mxu0 0.0
    %558 = vmatpush1.msra.mxu0 0.0
    %559 = vmatprep.subr.mxu0 0.0
    %560 = vmatpush1.msra.mxu0 0.0
    %561 = vmatprep.subr.mxu0 0.0
    %562 = vmatpush1.msra.mxu0 0.0
    %563 = vmatprep.subr.mxu0 0.0
    %564 = vmatpush1.msra.mxu0 0.0
    %565 = vmatprep.subr.mxu0 0.0
    %566 = vmatpush1.msra.mxu0 0.0
    %567 = vmatprep.subr.mxu0 0.0
    %568 = vmatpush1.msra.mxu0 0.0
    %569 = vmatprep.subr.mxu0 0.0
    %570 = vmatpush1.msra.mxu0 0.0
    %571 = vmatprep.subr.mxu0 0.0
    %572 = vmatpush1.msra.mxu0 0.0
    %573 = vmatprep.subr.mxu0 0.0
    %574 = vmatpush1.msra.mxu0 0.0
    %575 = vmatprep.subr.mxu0 0.0
    %576 = vmatpush1.msra.mxu0 0.0
    %577 = vmatprep.subr.mxu0 0.0
    %578 = vmatpush1.msra.mxu0 0.0
    %579 = vmatprep.subr.mxu0 0.0
    %580 = vmatpush1.msra.mxu0 0.0
    %581 = vmatprep.subr.mxu0 0.0
    %582 = vmatpush1.msra.mxu0 0.0
    %583 = vmatprep.subr.mxu0 0.0
    %584 = vmatpush1.msra.mxu0 0.0
    %585 = vmatprep.subr.mxu0 0.0
    %586 = vmatpush1.msra.mxu0 0.0
    %587 = vmatprep.subr.mxu0 0.0
    %588 = vmatpush1.msra.mxu0 0.0
    %589 = vmatprep.subr.mxu0 0.0
    %590 = vmatpush1.msra.mxu0 0.0
    %591 = vmatprep.subr.mxu0 0.0
    %592 = vmatpush1.msra.mxu0 0.0
    %593 = vmatprep.subr.mxu0 0.0
    %594 = vmatpush1.msra.mxu0 0.0
    %595 = vmatprep.subr.mxu0 0.0
    %596 = vmatpush1.msra.mxu0 0.0
    %597 = vmatprep.mubr.f32.mxu0 0.0
    %598 = vmatmul.mubr.f32.gmra.mrb[0].mxu0 %v389
    %v599 = vpop.f32.mrb[0].mxu0
    %v600 = vadd.f32 0.0, %v599
    %v601 = vpop.f32.mrb[0].mxu0
    %v602 = vadd.f32 0.0, %v601
    %603 = vdwg.mxu0
    %604 = vmatprep.subr.mxu0 %v363
    %605 = vmatpush1.msra.mxu0 %v362
    %606 = vmatprep.subr.mxu0 %v371
    %607 = vmatpush1.msra.mxu0 %v370
    %608 = vmatprep.subr.mxu0 %v379
    %609 = vmatpush1.msra.mxu0 %v378
    %610 = vmatprep.subr.mxu0 %v387
    %611 = vmatpush1.msra.mxu0 %v386
    %612 = vmatprep.subr.mxu0 0.0
    %613 = vmatpush1.msra.mxu0 0.0
    %614 = vmatprep.subr.mxu0 0.0
    %615 = vmatpush1.msra.mxu0 0.0
    %616 = vmatprep.subr.mxu0 0.0
    %617 = vmatpush1.msra.mxu0 0.0
    %618 = vmatprep.subr.mxu0 0.0
    %619 = vmatpush1.msra.mxu0 0.0
    %620 = vmatprep.subr.mxu0 0.0
    %621 = vmatpush1.msra.mxu0 0.0
    %622 = vmatprep.subr.mxu0 0.0
    %623 = vmatpush1.msra.mxu0 0.0
    %624 = vmatprep.subr.mxu0 0.0
    %625 = vmatpush1.msra.mxu0 0.0
    %626 = vmatprep.subr.mxu0 0.0
    %627 = vmatpush1.msra.mxu0 0.0
    %628 = vmatprep.subr.mxu0 0.0
    %629 = vmatpush1.msra.mxu0 0.0
    %630 = vmatprep.subr.mxu0 0.0
    %631 = vmatpush1.msra.mxu0 0.0
    %632 = vmatprep.subr.mxu0 0.0
    %633 = vmatpush1.msra.mxu0 0.0
    %634 = vmatprep.subr.mxu0 0.0
    %635 = vmatpush1.msra.mxu0 0.0
    %636 = vmatprep.subr.mxu0 0.0
    %637 = vmatpush1.msra.mxu0 0.0
    %638 = vmatprep.subr.mxu0 0.0
    %639 = vmatpush1.msra.mxu0 0.0
    %640 = vmatprep.subr.mxu0 0.0
    %641 = vmatpush1.msra.mxu0 0.0
    %642 = vmatprep.subr.mxu0 0.0
    %643 = vmatpush1.msra.mxu0 0.0
    %644 = vmatprep.subr.mxu0 0.0
    %645 = vmatpush1.msra.mxu0 0.0
    %646 = vmatprep.subr.mxu0 0.0
    %647 = vmatpush1.msra.mxu0 0.0
    %648 = vmatprep.subr.mxu0 0.0
    %649 = vmatpush1.msra.mxu0 0.0
    %650 = vmatprep.subr.mxu0 0.0
    %651 = vmatpush1.msra.mxu0 0.0
    %652 = vmatprep.subr.mxu0 0.0
    %653 = vmatpush1.msra.mxu0 0.0
    %654 = vmatprep.subr.mxu0 0.0
    %655 = vmatpush1.msra.mxu0 0.0
    %656 = vmatprep.subr.mxu0 0.0
    %657 = vmatpush1.msra.mxu0 0.0
    %658 = vmatprep.subr.mxu0 0.0
    %659 = vmatpush1.msra.mxu0 0.0
    %660 = vmatprep.subr.mxu0 0.0
    %661 = vmatpush1.msra.mxu0 0.0
    %662 = vmatprep.subr.mxu0 0.0
    %663 = vmatpush1.msra.mxu0 0.0
    %664 = vmatprep.subr.mxu0 0.0
    %665 = vmatpush1.msra.mxu0 0.0
    %666 = vmatprep.subr.mxu0 0.0
    %667 = vmatpush1.msra.mxu0 0.0
    %668 = vmatprep.mubr.f32.mxu0 0.0
    %669 = vmatmul.mubr.f32.gmra.mrb[0].mxu0 %v389
    %v670 = vpop.f32.mrb[0].mxu0
    %v671 = vadd.f32 0.0, %v670
    %v672 = vpop.f32.mrb[0].mxu0
    %v673 = vadd.f32 0.0, %v672
    %674 = vdwg.mxu0
    %v675 = vld [vmem:[%s13] sm:$0xff]
    %v676 = vld [vmem:[%s13 + $0x8] sm:$0xff]
    %v677 = vld [vmem:[%s13 + $0x10] sm:$0xff]
    %v678 = vld [vmem:[%s13 + $0x18] sm:$0xff]
    %v679 = vld [vmem:[%s13 + $0x20] sm:$0xff]
    %v680 = vld [vmem:[%s13 + $0x28] sm:$0xff]
    %v681 = vld [vmem:[%s13 + $0x30] sm:$0xff]
    %v682 = vld [vmem:[%s13 + $0x38] sm:$0xff]
    %v683 = vld [vmem:[%s13 + $0x40] sm:$0xff]
    %v684 = vld [vmem:[%s13 + $0x48] sm:$0xff]
    %v685 = vld [vmem:[%s13 + $0x50] sm:$0xff]
    %v686 = vld [vmem:[%s13 + $0x58] sm:$0xff]
    %v687 = vld [vmem:[%s13 + $0x60] sm:$0xff]
    %v688 = vld [vmem:[%s13 + $0x68] sm:$0xff]
    %v689 = vld [vmem:[%s13 + $0x70] sm:$0xff]
    %v690 = vld [vmem:[%s13 + $0x78] sm:$0xff]
    %v691 = vld [vmem:[%s13 + $0x80] sm:$0xff]
    %v692 = vld [vmem:[%s13 + $0x88] sm:$0xff]
    %v693 = vld [vmem:[%s13 + $0x90] sm:$0xff]
    %v694 = vld [vmem:[%s13 + $0x98] sm:$0xff]
    %v695 = vld [vmem:[%s13 + $0xa0] sm:$0xff]
    %v696 = vld [vmem:[%s13 + $0xa8] sm:$0xff]
    %v697 = vld [vmem:[%s13 + $0xb0] sm:$0xff]
    %v698 = vld [vmem:[%s13 + $0xb8] sm:$0xff]
    %v699 = vld [vmem:[%s13 + $0xc0] sm:$0xff]
    %v700 = vld [vmem:[%s13 + $0xc8] sm:$0xff]
    %v701 = vld [vmem:[%s13 + $0xd0] sm:$0xff]
    %v702 = vld [vmem:[%s13 + $0xd8] sm:$0xff]
    %v703 = vld [vmem:[%s13 + $0xe0] sm:$0xff]
    %v704 = vld [vmem:[%s13 + $0xe8] sm:$0xff]
    %v705 = vld [vmem:[%s13 + $0xf0] sm:$0xff]
    %v706 = vld [vmem:[%s13 + $0xf8] sm:$0xff]
    %v707 = vsel %vm78, %v353, 0
    %709 = vmatprep.subr.mxu0 %v676
    %710 = vmatpush1.msra.mxu0 %v675
    %711 = vmatprep.subr.mxu0 %v684
    %712 = vmatpush1.msra.mxu0 %v683
    %713 = vmatprep.subr.mxu0 %v692
    %714 = vmatpush1.msra.mxu0 %v691
    %715 = vmatprep.subr.mxu0 %v700
    %716 = vmatpush1.msra.mxu0 %v699
    %717 = vmatprep.subr.mxu0 0.0
    %718 = vmatpush1.msra.mxu0 0.0
    %719 = vmatprep.subr.mxu0 0.0
    %720 = vmatpush1.msra.mxu0 0.0
    %721 = vmatprep.subr.mxu0 0.0
    %722 = vmatpush1.msra.mxu0 0.0
    %723 = vmatprep.subr.mxu0 0.0
    %724 = vmatpush1.msra.mxu0 0.0
    %725 = vmatprep.subr.mxu0 0.0
    %726 = vmatpush1.msra.mxu0 0.0
    %727 = vmatprep.subr.mxu0 0.0
    %728 = vmatpush1.msra.mxu0 0.0
    %729 = vmatprep.subr.mxu0 0.0
    %730 = vmatpush1.msra.mxu0 0.0
    %731 = vmatprep.subr.mxu0 0.0
    %732 = vmatpush1.msra.mxu0 0.0
    %733 = vmatprep.subr.mxu0 0.0
    %734 = vmatpush1.msra.mxu0 0.0
    %735 = vmatprep.subr.mxu0 0.0
    %736 = vmatpush1.msra.mxu0 0.0
    %737 = vmatprep.subr.mxu0 0.0
    %738 = vmatpush1.msra.mxu0 0.0
    %739 = vmatprep.subr.mxu0 0.0
    %740 = vmatpush1.msra.mxu0 0.0
    %741 = vmatprep.subr.mxu0 0.0
    %742 = vmatpush1.msra.mxu0 0.0
    %743 = vmatprep.subr.mxu0 0.0
    %744 = vmatpush1.msra.mxu0 0.0
    %745 = vmatprep.subr.mxu0 0.0
    %746 = vmatpush1.msra.mxu0 0.0
    %747 = vmatprep.subr.mxu0 0.0
    %748 = vmatpush1.msra.mxu0 0.0
    %749 = vmatprep.subr.mxu0 0.0
    %750 = vmatpush1.msra.mxu0 0.0
    %751 = vmatprep.subr.mxu0 0.0
    %752 = vmatpush1.msra.mxu0 0.0
    %753 = vmatprep.subr.mxu0 0.0
    %754 = vmatpush1.msra.mxu0 0.0
    %755 = vmatprep.subr.mxu0 0.0
    %756 = vmatpush1.msra.mxu0 0.0
    %757 = vmatprep.subr.mxu0 0.0
    %758 = vmatpush1.msra.mxu0 0.0
    %759 = vmatprep.subr.mxu0 0.0
    %760 = vmatpush1.msra.mxu0 0.0
    %761 = vmatprep.subr.mxu0 0.0
    %762 = vmatpush1.msra.mxu0 0.0
    %763 = vmatprep.subr.mxu0 0.0
    %764 = vmatpush1.msra.mxu0 0.0
    %765 = vmatprep.subr.mxu0 0.0
    %766 = vmatpush1.msra.mxu0 0.0
    %767 = vmatprep.subr.mxu0 0.0
    %768 = vmatpush1.msra.mxu0 0.0
    %769 = vmatprep.subr.mxu0 0.0
    %770 = vmatpush1.msra.mxu0 0.0
    %771 = vmatprep.subr.mxu0 0.0
    %772 = vmatpush1.msra.mxu0 0.0
    %773 = vmatprep.mubr.f32.mxu0 0.0
    %774 = vmatmul.mubr.f32.gmra.mrb[0].mxu0 %v707
    %v775 = vpop.f32.mrb[0].mxu0
    %v776 = vadd.f32 0.0, %v775
    %v777 = vpop.f32.mrb[0].mxu0
    %v778 = vadd.f32 0.0, %v777
    %779 = vdwg.mxu0
    %780 = vmatprep.subr.mxu0 %v678
    %781 = vmatpush1.msra.mxu0 %v677
    %782 = vmatprep.subr.mxu0 %v686
    %783 = vmatpush1.msra.mxu0 %v685
    %784 = vmatprep.subr.mxu0 %v694
    %785 = vmatpush1.msra.mxu0 %v693
    %786 = vmatprep.subr.mxu0 %v702
    %787 = vmatpush1.msra.mxu0 %v701
    %788 = vmatprep.subr.mxu0 0.0
    %789 = vmatpush1.msra.mxu0 0.0
    %790 = vmatprep.subr.mxu0 0.0
    %791 = vmatpush1.msra.mxu0 0.0
    %792 = vmatprep.subr.mxu0 0.0
    %793 = vmatpush1.msra.mxu0 0.0
    %794 = vmatprep.subr.mxu0 0.0
    %795 = vmatpush1.msra.mxu0 0.0
    %796 = vmatprep.subr.mxu0 0.0
    %797 = vmatpush1.msra.mxu0 0.0
    %798 = vmatprep.subr.mxu0 0.0
    %799 = vmatpush1.msra.mxu0 0.0
    %800 = vmatprep.subr.mxu0 0.0
    %801 = vmatpush1.msra.mxu0 0.0
    %802 = vmatprep.subr.mxu0 0.0
    %803 = vmatpush1.msra.mxu0 0.0
    %804 = vmatprep.subr.mxu0 0.0
    %805 = vmatpush1.msra.mxu0 0.0
    %806 = vmatprep.subr.mxu0 0.0
    %807 = vmatpush1.msra.mxu0 0.0
    %808 = vmatprep.subr.mxu0 0.0
    %809 = vmatpush1.msra.mxu0 0.0
    %810 = vmatprep.subr.mxu0 0.0
    %811 = vmatpush1.msra.mxu0 0.0
    %812 = vmatprep.subr.mxu0 0.0
    %813 = vmatpush1.msra.mxu0 0.0
    %814 = vmatprep.subr.mxu0 0.0
    %815 = vmatpush1.msra.mxu0 0.0
    %816 = vmatprep.subr.mxu0 0.0
    %817 = vmatpush1.msra.mxu0 0.0
    %818 = vmatprep.subr.mxu0 0.0
    %819 = vmatpush1.msra.mxu0 0.0
    %820 = vmatprep.subr.mxu0 0.0
    %821 = vmatpush1.msra.mxu0 0.0
    %822 = vmatprep.subr.mxu0 0.0
    %823 = vmatpush1.msra.mxu0 0.0
    %824 = vmatprep.subr.mxu0 0.0
    %825 = vmatpush1.msra.mxu0 0.0
    %826 = vmatprep.subr.mxu0 0.0
    %827 = vmatpush1.msra.mxu0 0.0
    %828 = vmatprep.subr.mxu0 0.0
    %829 = vmatpush1.msra.mxu0 0.0
    %830 = vmatprep.subr.mxu0 0.0
    %831 = vmatpush1.msra.mxu0 0.0
    %832 = vmatprep.subr.mxu0 0.0
    %833 = vmatpush1.msra.mxu0 0.0
    %834 = vmatprep.subr.mxu0 0.0
    %835 = vmatpush1.msra.mxu0 0.0
    %836 = vmatprep.subr.mxu0 0.0
    %837 = vmatpush1.msra.mxu0 0.0
    %838 = vmatprep.subr.mxu0 0.0
    %839 = vmatpush1.msra.mxu0 0.0
    %840 = vmatprep.subr.mxu0 0.0
    %841 = vmatpush1.msra.mxu0 0.0
    %842 = vmatprep.subr.mxu0 0.0
    %843 = vmatpush1.msra.mxu0 0.0
    %844 = vmatprep.mubr.f32.mxu0 0.0
    %845 = vmatmul.mubr.f32.gmra.mrb[0].mxu0 %v707
    %v846 = vpop.f32.mrb[0].mxu0
    %v847 = vadd.f32 0.0, %v846
    %v848 = vpop.f32.mrb[0].mxu0
    %v849 = vadd.f32 0.0, %v848
    %850 = vdwg.mxu0
    %851 = vmatprep.subr.mxu0 %v680
    %852 = vmatpush1.msra.mxu0 %v679
    %853 = vmatprep.subr.mxu0 %v688
    %854 = vmatpush1.msra.mxu0 %v687
    %855 = vmatprep.subr.mxu0 %v696
    %856 = vmatpush1.msra.mxu0 %v695
    %857 = vmatprep.subr.mxu0 %v704
    %858 = vmatpush1.msra.mxu0 %v703
    %859 = vmatprep.subr.mxu0 0.0
    %860 = vmatpush1.msra.mxu0 0.0
    %861 = vmatprep.subr.mxu0 0.0
    %862 = vmatpush1.msra.mxu0 0.0
    %863 = vmatprep.subr.mxu0 0.0
    %864 = vmatpush1.msra.mxu0 0.0
    %865 = vmatprep.subr.mxu0 0.0
    %866 = vmatpush1.msra.mxu0 0.0
    %867 = vmatprep.subr.mxu0 0.0
    %868 = vmatpush1.msra.mxu0 0.0
    %869 = vmatprep.subr.mxu0 0.0
    %870 = vmatpush1.msra.mxu0 0.0
    %871 = vmatprep.subr.mxu0 0.0
    %872 = vmatpush1.msra.mxu0 0.0
    %873 = vmatprep.subr.mxu0 0.0
    %874 = vmatpush1.msra.mxu0 0.0
    %875 = vmatprep.subr.mxu0 0.0
    %876 = vmatpush1.msra.mxu0 0.0
    %877 = vmatprep.subr.mxu0 0.0
    %878 = vmatpush1.msra.mxu0 0.0
    %879 = vmatprep.subr.mxu0 0.0
    %880 = vmatpush1.msra.mxu0 0.0
    %881 = vmatprep.subr.mxu0 0.0
    %882 = vmatpush1.msra.mxu0 0.0
    %883 = vmatprep.subr.mxu0 0.0
    %884 = vmatpush1.msra.mxu0 0.0
    %885 = vmatprep.subr.mxu0 0.0
    %886 = vmatpush1.msra.mxu0 0.0
    %887 = vmatprep.subr.mxu0 0.0
    %888 = vmatpush1.msra.mxu0 0.0
    %889 = vmatprep.subr.mxu0 0.0
    %890 = vmatpush1.msra.mxu0 0.0
    %891 = vmatprep.subr.mxu0 0.0
    %892 = vmatpush1.msra.mxu0 0.0
    %893 = vmatprep.subr.mxu0 0.0
    %894 = vmatpush1.msra.mxu0 0.0
    %895 = vmatprep.subr.mxu0 0.0
    %896 = vmatpush1.msra.mxu0 0.0
    %897 = vmatprep.subr.mxu0 0.0
    %898 = vmatpush1.msra.mxu0 0.0
    %899 = vmatprep.subr.mxu0 0.0
    %900 = vmatpush1.msra.mxu0 0.0
    %901 = vmatprep.subr.mxu0 0.0
    %902 = vmatpush1.msra.mxu0 0.0
    %903 = vmatprep.subr.mxu0 0.0
    %904 = vmatpush1.msra.mxu0 0.0
    %905 = vmatprep.subr.mxu0 0.0
    %906 = vmatpush1.msra.mxu0 0.0
    %907 = vmatprep.subr.mxu0 0.0
    %908 = vmatpush1.msra.mxu0 0.0
    %909 = vmatprep.subr.mxu0 0.0
    %910 = vmatpush1.msra.mxu0 0.0
    %911 = vmatprep.subr.mxu0 0.0
    %912 = vmatpush1.msra.mxu0 0.0
    %913 = vmatprep.subr.mxu0 0.0
    %914 = vmatpush1.msra.mxu0 0.0
    %915 = vmatprep.mubr.f32.mxu0 0.0
    %916 = vmatmul.mubr.f32.gmra.mrb[0].mxu0 %v707
    %v917 = vpop.f32.mrb[0].mxu0
    %v918 = vadd.f32 0.0, %v917
    %v919 = vpop.f32.mrb[0].mxu0
    %v920 = vadd.f32 0.0, %v919
    %921 = vdwg.mxu0
    %922 = vmatprep.subr.mxu0 %v682
    %923 = vmatpush1.msra.mxu0 %v681
    %924 = vmatprep.subr.mxu0 %v690
    %925 = vmatpush1.msra.mxu0 %v689
    %926 = vmatprep.subr.mxu0 %v698
    %927 = vmatpush1.msra.mxu0 %v697
    %928 = vmatprep.subr.mxu0 %v706
    %929 = vmatpush1.msra.mxu0 %v705
    %930 = vmatprep.subr.mxu0 0.0
    %931 = vmatpush1.msra.mxu0 0.0
    %932 = vmatprep.subr.mxu0 0.0
    %933 = vmatpush1.msra.mxu0 0.0
    %934 = vmatprep.subr.mxu0 0.0
    %935 = vmatpush1.msra.mxu0 0.0
    %936 = vmatprep.subr.mxu0 0.0
    %937 = vmatpush1.msra.mxu0 0.0
    %938 = vmatprep.subr.mxu0 0.0
    %939 = vmatpush1.msra.mxu0 0.0
    %940 = vmatprep.subr.mxu0 0.0
    %941 = vmatpush1.msra.mxu0 0.0
    %942 = vmatprep.subr.mxu0 0.0
    %943 = vmatpush1.msra.mxu0 0.0
    %944 = vmatprep.subr.mxu0 0.0
    %945 = vmatpush1.msra.mxu0 0.0
    %946 = vmatprep.subr.mxu0 0.0
    %947 = vmatpush1.msra.mxu0 0.0
    %948 = vmatprep.subr.mxu0 0.0
    %949 = vmatpush1.msra.mxu0 0.0
    %950 = vmatprep.subr.mxu0 0.0
    %951 = vmatpush1.msra.mxu0 0.0
    %952 = vmatprep.subr.mxu0 0.0
    %953 = vmatpush1.msra.mxu0 0.0
    %954 = vmatprep.subr.mxu0 0.0
    %955 = vmatpush1.msra.mxu0 0.0
    %956 = vmatprep.subr.mxu0 0.0
    %957 = vmatpush1.msra.mxu0 0.0
    %958 = vmatprep.subr.mxu0 0.0
    %959 = vmatpush1.msra.mxu0 0.0
    %960 = vmatprep.subr.mxu0 0.0
    %961 = vmatpush1.msra.mxu0 0.0
    %962 = vmatprep.subr.mxu0 0.0
    %963 = vmatpush1.msra.mxu0 0.0
    %964 = vmatprep.subr.mxu0 0.0
    %965 = vmatpush1.msra.mxu0 0.0
    %966 = vmatprep.subr.mxu0 0.0
    %967 = vmatpush1.msra.mxu0 0.0
    %968 = vmatprep.subr.mxu0 0.0
    %969 = vmatpush1.msra.mxu0 0.0
    %970 = vmatprep.subr.mxu0 0.0
    %971 = vmatpush1.msra.mxu0 0.0
    %972 = vmatprep.subr.mxu0 0.0
    %973 = vmatpush1.msra.mxu0 0.0
    %974 = vmatprep.subr.mxu0 0.0
    %975 = vmatpush1.msra.mxu0 0.0
    %976 = vmatprep.subr.mxu0 0.0
    %977 = vmatpush1.msra.mxu0 0.0
    %978 = vmatprep.subr.mxu0 0.0
    %979 = vmatpush1.msra.mxu0 0.0
    %980 = vmatprep.subr.mxu0 0.0
    %981 = vmatpush1.msra.mxu0 0.0
    %982 = vmatprep.subr.mxu0 0.0
    %983 = vmatpush1.msra.mxu0 0.0
    %984 = vmatprep.subr.mxu0 0.0
    %985 = vmatpush1.msra.mxu0 0.0
    %986 = vmatprep.mubr.f32.mxu0 0.0
    %987 = vmatmul.mubr.f32.gmra.mrb[0].mxu0 %v707
    %v988 = vpop.f32.mrb[0].mxu0
    %v989 = vadd.f32 0.0, %v988
    %v990 = vpop.f32.mrb[0].mxu0
    %v991 = vadd.f32 0.0, %v990
    %992 = vdwg.mxu0
    %v993 = vmul.f32 %v458, %v776
    %v994 = vmul.f32 %v460, %v778
    %v995 = vmul.f32 %v529, %v847
    %v996 = vmul.f32 %v531, %v849
    %v997 = vmul.f32 %v600, %v918
    %v998 = vmul.f32 %v602, %v920
    %v999 = vmul.f32 %v671, %v989
    %v1000 = vmul.f32 %v673, %v991
    %1001 = vst [vmem:[#allocation8] sm:$0xff] %v993
    %1002 = vst [vmem:[#allocation8 + $0x8] sm:$0xff] %v994
    %1003 = vst [vmem:[#allocation8 + $0x10] sm:$0xff] %v995
    %1004 = vst [vmem:[#allocation8 + $0x18] sm:$0xff] %v996
    %1005 = vst [vmem:[#allocation8 + $0x20] sm:$0xff] %v997
    %1006 = vst [vmem:[#allocation8 + $0x28] sm:$0xff] %v998
    %1007 = vst [vmem:[#allocation8 + $0x30] sm:$0xff] %v999
    %1008 = vst [vmem:[#allocation8 + $0x38] sm:$0xff] %v1000
    %1009 = vrot.lane.b32.xlu0 %v171, 96
    %v1010 = vpop.permute.xlu0 %1009
    %v1012 = vmul.f32 %v171, %v1010
    %1014 = vrot.lane.b32.xlu0 %v1012, 64
    %v1015 = vpop.permute.xlu0 %1014
    %v1017 = vsel %vm78, %v1015, 0.0
    %1018 = vadd.xlane.f32.xlu0 %v1017
    %v1019 = vpop.xlane.xlu0 %1018
    %v1020 = vld [vmem:[%s2] sm:$0xff]
    %1022 = vrot.lane.b32.xlu0 %v1020, 64
    %v1023 = vpop.permute.xlu0 %1022
    %v1025 = vmul.f32 %v350, %v1023
    %1027 = vrot.lane.b32.xlu0 %v1025, 64
    %v1028 = vpop.permute.xlu0 %1027
    %v1030 = vsel %vm78, %v1028, 0.0
    %1031 = vadd.xlane.f32.xlu0 %v1030
    %v1032 = vpop.xlane.xlu0 %1031
    %v1033 = vadd.f32 %v1019, %v1032
    %vm1034 = vcmask 7168
    %1035 = vst.msk [vmem:[%s15] sm:$0xff] %vm1034, %v1033
    %v1036 = vld [vmem:[%s13] sm:$0xff]
    %v1037 = vld [vmem:[%s13 + $0x8] sm:$0xff]
    %v1038 = vld [vmem:[%s13 + $0x10] sm:$0xff]
    %v1039 = vld [vmem:[%s13 + $0x18] sm:$0xff]
    %v1040 = vld [vmem:[%s13 + $0x20] sm:$0xff]
    %v1041 = vld [vmem:[%s13 + $0x28] sm:$0xff]
    %v1042 = vld [vmem:[%s13 + $0x30] sm:$0xff]
    %v1043 = vld [vmem:[%s13 + $0x38] sm:$0xff]
    %v1044 = vld [vmem:[%s13 + $0x40] sm:$0xff]
    %v1045 = vld [vmem:[%s13 + $0x48] sm:$0xff]
    %v1046 = vld [vmem:[%s13 + $0x50] sm:$0xff]
    %v1047 = vld [vmem:[%s13 + $0x58] sm:$0xff]
    %v1048 = vld [vmem:[%s13 + $0x60] sm:$0xff]
    %v1049 = vld [vmem:[%s13 + $0x68] sm:$0xff]
    %v1050 = vld [vmem:[%s13 + $0x70] sm:$0xff]
    %v1051 = vld [vmem:[%s13 + $0x78] sm:$0xff]
    %v1052 = vld [vmem:[%s13 + $0x80] sm:$0xff]
    %v1053 = vld [vmem:[%s13 + $0x88] sm:$0xff]
    %v1054 = vld [vmem:[%s13 + $0x90] sm:$0xff]
    %v1055 = vld [vmem:[%s13 + $0x98] sm:$0xff]
    %v1056 = vld [vmem:[%s13 + $0xa0] sm:$0xff]
    %v1057 = vld [vmem:[%s13 + $0xa8] sm:$0xff]
    %v1058 = vld [vmem:[%s13 + $0xb0] sm:$0xff]
    %v1059 = vld [vmem:[%s13 + $0xb8] sm:$0xff]
    %v1060 = vld [vmem:[%s13 + $0xc0] sm:$0xff]
    %v1061 = vld [vmem:[%s13 + $0xc8] sm:$0xff]
    %v1062 = vld [vmem:[%s13 + $0xd0] sm:$0xff]
    %v1063 = vld [vmem:[%s13 + $0xd8] sm:$0xff]
    %v1064 = vld [vmem:[%s13 + $0xe0] sm:$0xff]
    %v1065 = vld [vmem:[%s13 + $0xe8] sm:$0xff]
    %v1066 = vld [vmem:[%s13 + $0xf0] sm:$0xff]
    %v1067 = vld [vmem:[%s13 + $0xf8] sm:$0xff]
    %1069 = vrot.lane.b32.xlu0 %v350, 64
    %v1070 = vpop.permute.xlu0 %1069
    %v1071 = vsel %vm78, %v1070, 0
    %1073 = vmatprep.subr.mxu0 %v1037
    %1074 = vmatpush1.msra.mxu0 %v1036
    %1075 = vmatprep.subr.mxu0 %v1045
    %1076 = vmatpush1.msra.mxu0 %v1044
    %1077 = vmatprep.subr.mxu0 %v1053
    %1078 = vmatpush1.msra.mxu0 %v1052
    %1079 = vmatprep.subr.mxu0 %v1061
    %1080 = vmatpush1.msra.mxu0 %v1060
    %1081 = vmatprep.subr.mxu0 0.0
    %1082 = vmatpush1.msra.mxu0 0.0
    %1083 = vmatprep.subr.mxu0 0.0
    %1084 = vmatpush1.msra.mxu0 0.0
    %1085 = vmatprep.subr.mxu0 0.0
    %1086 = vmatpush1.msra.mxu0 0.0
    %1087 = vmatprep.subr.mxu0 0.0
    %1088 = vmatpush1.msra.mxu0 0.0
    %1089 = vmatprep.subr.mxu0 0.0
    %1090 = vmatpush1.msra.mxu0 0.0
    %1091 = vmatprep.subr.mxu0 0.0
    %1092 = vmatpush1.msra.mxu0 0.0
    %1093 = vmatprep.subr.mxu0 0.0
    %1094 = vmatpush1.msra.mxu0 0.0
    %1095 = vmatprep.subr.mxu0 0.0
    %1096 = vmatpush1.msra.mxu0 0.0
    %1097 = vmatprep.subr.mxu0 0.0
    %1098 = vmatpush1.msra.mxu0 0.0
    %1099 = vmatprep.subr.mxu0 0.0
    %1100 = vmatpush1.msra.mxu0 0.0
    %1101 = vmatprep.subr.mxu0 0.0
    %1102 = vmatpush1.msra.mxu0 0.0
    %1103 = vmatprep.subr.mxu0 0.0
    %1104 = vmatpush1.msra.mxu0 0.0
    %1105 = vmatprep.subr.mxu0 0.0
    %1106 = vmatpush1.msra.mxu0 0.0
    %1107 = vmatprep.subr.mxu0 0.0
    %1108 = vmatpush1.msra.mxu0 0.0
    %1109 = vmatprep.subr.mxu0 0.0
    %1110 = vmatpush1.msra.mxu0 0.0
    %1111 = vmatprep.subr.mxu0 0.0
    %1112 = vmatpush1.msra.mxu0 0.0
    %1113 = vmatprep.subr.mxu0 0.0
    %1114 = vmatpush1.msra.mxu0 0.0
    %1115 = vmatprep.subr.mxu0 0.0
    %1116 = vmatpush1.msra.mxu0 0.0
    %1117 = vmatprep.subr.mxu0 0.0
    %1118 = vmatpush1.msra.mxu0 0.0
    %1119 = vmatprep.subr.mxu0 0.0
    %1120 = vmatpush1.msra.mxu0 0.0
    %1121 = vmatprep.subr.mxu0 0.0
    %1122 = vmatpush1.msra.mxu0 0.0
    %1123 = vmatprep.subr.mxu0 0.0
    %1124 = vmatpush1.msra.mxu0 0.0
    %1125 = vmatprep.subr.mxu0 0.0
    %1126 = vmatpush1.msra.mxu0 0.0
    %1127 = vmatprep.subr.mxu0 0.0
    %1128 = vmatpush1.msra.mxu0 0.0
    %1129 = vmatprep.subr.mxu0 0.0
    %1130 = vmatpush1.msra.mxu0 0.0
    %1131 = vmatprep.subr.mxu0 0.0
    %1132 = vmatpush1.msra.mxu0 0.0
    %1133 = vmatprep.subr.mxu0 0.0
    %1134 = vmatpush1.msra.mxu0 0.0
    %1135 = vmatprep.subr.mxu0 0.0
    %1136 = vmatpush1.msra.mxu0 0.0
    %1137 = vmatprep.mubr.f32.mxu0 0.0
    %1138 = vmatmul.mubr.f32.gmra.mrb[0].mxu0 %v1071
    %v1139 = vpop.f32.mrb[0].mxu0
    %v1140 = vadd.f32 0.0, %v1139
    %v1141 = vpop.f32.mrb[0].mxu0
    %v1142 = vadd.f32 0.0, %v1141
    %1143 = vdwg.mxu0
    %1144 = vmatprep.subr.mxu0 %v1039
    %1145 = vmatpush1.msra.mxu0 %v1038
    %1146 = vmatprep.subr.mxu0 %v1047
    %1147 = vmatpush1.msra.mxu0 %v1046
    %1148 = vmatprep.subr.mxu0 %v1055
    %1149 = vmatpush1.msra.mxu0 %v1054
    %1150 = vmatprep.subr.mxu0 %v1063
    %1151 = vmatpush1.msra.mxu0 %v1062
    %1152 = vmatprep.subr.mxu0 0.0
    %1153 = vmatpush1.msra.mxu0 0.0
    %1154 = vmatprep.subr.mxu0 0.0
    %1155 = vmatpush1.msra.mxu0 0.0
    %1156 = vmatprep.subr.mxu0 0.0
    %1157 = vmatpush1.msra.mxu0 0.0
    %1158 = vmatprep.subr.mxu0 0.0
    %1159 = vmatpush1.msra.mxu0 0.0
    %1160 = vmatprep.subr.mxu0 0.0
    %1161 = vmatpush1.msra.mxu0 0.0
    %1162 = vmatprep.subr.mxu0 0.0
    %1163 = vmatpush1.msra.mxu0 0.0
    %1164 = vmatprep.subr.mxu0 0.0
    %1165 = vmatpush1.msra.mxu0 0.0
    %1166 = vmatprep.subr.mxu0 0.0
    %1167 = vmatpush1.msra.mxu0 0.0
    %1168 = vmatprep.subr.mxu0 0.0
    %1169 = vmatpush1.msra.mxu0 0.0
    %1170 = vmatprep.subr.mxu0 0.0
    %1171 = vmatpush1.msra.mxu0 0.0
    %1172 = vmatprep.subr.mxu0 0.0
    %1173 = vmatpush1.msra.mxu0 0.0
    %1174 = vmatprep.subr.mxu0 0.0
    %1175 = vmatpush1.msra.mxu0 0.0
    %1176 = vmatprep.subr.mxu0 0.0
    %1177 = vmatpush1.msra.mxu0 0.0
    %1178 = vmatprep.subr.mxu0 0.0
    %1179 = vmatpush1.msra.mxu0 0.0
    %1180 = vmatprep.subr.mxu0 0.0
    %1181 = vmatpush1.msra.mxu0 0.0
    %1182 = vmatprep.subr.mxu0 0.0
    %1183 = vmatpush1.msra.mxu0 0.0
    %1184 = vmatprep.subr.mxu0 0.0
    %1185 = vmatpush1.msra.mxu0 0.0
    %1186 = vmatprep.subr.mxu0 0.0
    %1187 = vmatpush1.msra.mxu0 0.0
    %1188 = vmatprep.subr.mxu0 0.0
    %1189 = vmatpush1.msra.mxu0 0.0
    %1190 = vmatprep.subr.mxu0 0.0
    %1191 = vmatpush1.msra.mxu0 0.0
    %1192 = vmatprep.subr.mxu0 0.0
    %1193 = vmatpush1.msra.mxu0 0.0
    %1194 = vmatprep.subr.mxu0 0.0
    %1195 = vmatpush1.msra.mxu0 0.0
    %1196 = vmatprep.subr.mxu0 0.0
    %1197 = vmatpush1.msra.mxu0 0.0
    %1198 = vmatprep.subr.mxu0 0.0
    %1199 = vmatpush1.msra.mxu0 0.0
    %1200 = vmatprep.subr.mxu0 0.0
    %1201 = vmatpush1.msra.mxu0 0.0
    %1202 = vmatprep.subr.mxu0 0.0
    %1203 = vmatpush1.msra.mxu0 0.0
    %1204 = vmatprep.subr.mxu0 0.0
    %1205 = vmatpush1.msra.mxu0 0.0
    %1206 = vmatprep.subr.mxu0 0.0
    %1207 = vmatpush1.msra.mxu0 0.0
    %1208 = vmatprep.mubr.f32.mxu0 0.0
    %1209 = vmatmul.mubr.f32.gmra.mrb[0].mxu0 %v1071
    %v1210 = vpop.f32.mrb[0].mxu0
    %v1211 = vadd.f32 0.0, %v1210
    %v1212 = vpop.f32.mrb[0].mxu0
    %v1213 = vadd.f32 0.0, %v1212
    %1214 = vdwg.mxu0
    %1215 = vmatprep.subr.mxu0 %v1041
    %1216 = vmatpush1.msra.mxu0 %v1040
    %1217 = vmatprep.subr.mxu0 %v1049
    %1218 = vmatpush1.msra.mxu0 %v1048
    %1219 = vmatprep.subr.mxu0 %v1057
    %1220 = vmatpush1.msra.mxu0 %v1056
    %1221 = vmatprep.subr.mxu0 %v1065
    %1222 = vmatpush1.msra.mxu0 %v1064
    %1223 = vmatprep.subr.mxu0 0.0
    %1224 = vmatpush1.msra.mxu0 0.0
    %1225 = vmatprep.subr.mxu0 0.0
    %1226 = vmatpush1.msra.mxu0 0.0
    %1227 = vmatprep.subr.mxu0 0.0
    %1228 = vmatpush1.msra.mxu0 0.0
    %1229 = vmatprep.subr.mxu0 0.0
    %1230 = vmatpush1.msra.mxu0 0.0
    %1231 = vmatprep.subr.mxu0 0.0
    %1232 = vmatpush1.msra.mxu0 0.0
    %1233 = vmatprep.subr.mxu0 0.0
    %1234 = vmatpush1.msra.mxu0 0.0
    %1235 = vmatprep.subr.mxu0 0.0
    %1236 = vmatpush1.msra.mxu0 0.0
    %1237 = vmatprep.subr.mxu0 0.0
    %1238 = vmatpush1.msra.mxu0 0.0
    %1239 = vmatprep.subr.mxu0 0.0
    %1240 = vmatpush1.msra.mxu0 0.0
    %1241 = vmatprep.subr.mxu0 0.0
    %1242 = vmatpush1.msra.mxu0 0.0
    %1243 = vmatprep.subr.mxu0 0.0
    %1244 = vmatpush1.msra.mxu0 0.0
    %1245 = vmatprep.subr.mxu0 0.0
    %1246 = vmatpush1.msra.mxu0 0.0
    %1247 = vmatprep.subr.mxu0 0.0
    %1248 = vmatpush1.msra.mxu0 0.0
    %1249 = vmatprep.subr.mxu0 0.0
    %1250 = vmatpush1.msra.mxu0 0.0
    %1251 = vmatprep.subr.mxu0 0.0
    %1252 = vmatpush1.msra.mxu0 0.0
    %1253 = vmatprep.subr.mxu0 0.0
    %1254 = vmatpush1.msra.mxu0 0.0
    %1255 = vmatprep.subr.mxu0 0.0
    %1256 = vmatpush1.msra.mxu0 0.0
    %1257 = vmatprep.subr.mxu0 0.0
    %1258 = vmatpush1.msra.mxu0 0.0
    %1259 = vmatprep.subr.mxu0 0.0
    %1260 = vmatpush1.msra.mxu0 0.0
    %1261 = vmatprep.subr.mxu0 0.0
    %1262 = vmatpush1.msra.mxu0 0.0
    %1263 = vmatprep.subr.mxu0 0.0
    %1264 = vmatpush1.msra.mxu0 0.0
    %1265 = vmatprep.subr.mxu0 0.0
    %1266 = vmatpush1.msra.mxu0 0.0
    %1267 = vmatprep.subr.mxu0 0.0
    %1268 = vmatpush1.msra.mxu0 0.0
    %1269 = vmatprep.subr.mxu0 0.0
    %1270 = vmatpush1.msra.mxu0 0.0
    %1271 = vmatprep.subr.mxu0 0.0
    %1272 = vmatpush1.msra.mxu0 0.0
    %1273 = vmatprep.subr.mxu0 0.0
    %1274 = vmatpush1.msra.mxu0 0.0
    %1275 = vmatprep.subr.mxu0 0.0
    %1276 = vmatpush1.msra.mxu0 0.0
    %1277 = vmatprep.subr.mxu0 0.0
    %1278 = vmatpush1.msra.mxu0 0.0
    %1279 = vmatprep.mubr.f32.mxu0 0.0
    %1280 = vmatmul.mubr.f32.gmra.mrb[0].mxu0 %v1071
    %v1281 = vpop.f32.mrb[0].mxu0
    %v1282 = vadd.f32 0.0, %v1281
    %v1283 = vpop.f32.mrb[0].mxu0
    %v1284 = vadd.f32 0.0, %v1283
    %1285 = vdwg.mxu0
    %1286 = vmatprep.subr.mxu0 %v1043
    %1287 = vmatpush1.msra.mxu0 %v1042
    %1288 = vmatprep.subr.mxu0 %v1051
    %1289 = vmatpush1.msra.mxu0 %v1050
    %1290 = vmatprep.subr.mxu0 %v1059
    %1291 = vmatpush1.msra.mxu0 %v1058
    %1292 = vmatprep.subr.mxu0 %v1067
    %1293 = vmatpush1.msra.mxu0 %v1066
    %1294 = vmatprep.subr.mxu0 0.0
    %1295 = vmatpush1.msra.mxu0 0.0
    %1296 = vmatprep.subr.mxu0 0.0
    %1297 = vmatpush1.msra.mxu0 0.0
    %1298 = vmatprep.subr.mxu0 0.0
    %1299 = vmatpush1.msra.mxu0 0.0
    %1300 = vmatprep.subr.mxu0 0.0
    %1301 = vmatpush1.msra.mxu0 0.0
    %1302 = vmatprep.subr.mxu0 0.0
    %1303 = vmatpush1.msra.mxu0 0.0
    %1304 = vmatprep.subr.mxu0 0.0
    %1305 = vmatpush1.msra.mxu0 0.0
    %1306 = vmatprep.subr.mxu0 0.0
    %1307 = vmatpush1.msra.mxu0 0.0
    %1308 = vmatprep.subr.mxu0 0.0
    %1309 = vmatpush1.msra.mxu0 0.0
    %1310 = vmatprep.subr.mxu0 0.0
    %1311 = vmatpush1.msra.mxu0 0.0
    %1312 = vmatprep.subr.mxu0 0.0
    %1313 = vmatpush1.msra.mxu0 0.0
    %1314 = vmatprep.subr.mxu0 0.0
    %1315 = vmatpush1.msra.mxu0 0.0
    %1316 = vmatprep.subr.mxu0 0.0
    %1317 = vmatpush1.msra.mxu0 0.0
    %1318 = vmatprep.subr.mxu0 0.0
    %1319 = vmatpush1.msra.mxu0 0.0
    %1320 = vmatprep.subr.mxu0 0.0
    %1321 = vmatpush1.msra.mxu0 0.0
    %1322 = vmatprep.subr.mxu0 0.0
    %1323 = vmatpush1.msra.mxu0 0.0
    %1324 = vmatprep.subr.mxu0 0.0
    %1325 = vmatpush1.msra.mxu0 0.0
    %1326 = vmatprep.subr.mxu0 0.0
    %1327 = vmatpush1.msra.mxu0 0.0
    %1328 = vmatprep.subr.mxu0 0.0
    %1329 = vmatpush1.msra.mxu0 0.0
    %1330 = vmatprep.subr.mxu0 0.0
    %1331 = vmatpush1.msra.mxu0 0.0
    %1332 = vmatprep.subr.mxu0 0.0
    %1333 = vmatpush1.msra.mxu0 0.0
    %1334 = vmatprep.subr.mxu0 0.0
    %1335 = vmatpush1.msra.mxu0 0.0
    %1336 = vmatprep.subr.mxu0 0.0
    %1337 = vmatpush1.msra.mxu0 0.0
    %1338 = vmatprep.subr.mxu0 0.0
    %1339 = vmatpush1.msra.mxu0 0.0
    %1340 = vmatprep.subr.mxu0 0.0
    %1341 = vmatpush1.msra.mxu0 0.0
    %1342 = vmatprep.subr.mxu0 0.0
    %1343 = vmatpush1.msra.mxu0 0.0
    %1344 = vmatprep.subr.mxu0 0.0
    %1345 = vmatpush1.msra.mxu0 0.0
    %1346 = vmatprep.subr.mxu0 0.0
    %1347 = vmatpush1.msra.mxu0 0.0
    %1348 = vmatprep.subr.mxu0 0.0
    %1349 = vmatpush1.msra.mxu0 0.0
    %1350 = vmatprep.mubr.f32.mxu0 0.0
    %1351 = vmatmul.mubr.f32.gmra.mrb[0].mxu0 %v1071
    %v1352 = vpop.f32.mrb[0].mxu0
    %v1353 = vadd.f32 0.0, %v1352
    %v1354 = vpop.f32.mrb[0].mxu0
    %v1355 = vadd.f32 0.0, %v1354
    %1356 = vdwg.mxu0
    %v1357 = vmul.f32 %v168, %v1019
    %v1358 = vld [vmem:[%s3] sm:$0xff]
    %v1359 = vld [vmem:[%s3 + $0x8] sm:$0xff]
    %v1360 = vld [vmem:[%s3 + $0x10] sm:$0xff]
    %v1361 = vld [vmem:[%s3 + $0x18] sm:$0xff]
    %v1362 = vld [vmem:[%s3 + $0x20] sm:$0xff]
    %v1363 = vld [vmem:[%s3 + $0x28] sm:$0xff]
    %v1364 = vld [vmem:[%s3 + $0x30] sm:$0xff]
    %v1365 = vld [vmem:[%s3 + $0x38] sm:$0xff]
    %v1366 = vmul.f32 %v1358, %v1140
    %v1367 = vmul.f32 %v1359, %v1142
    %v1368 = vmul.f32 %v1360, %v1211
    %v1369 = vmul.f32 %v1361, %v1213
    %v1370 = vmul.f32 %v1362, %v1282
    %v1371 = vmul.f32 %v1363, %v1284
    %v1372 = vmul.f32 %v1364, %v1353
    %v1373 = vmul.f32 %v1365, %v1355
    %v1374 = vld [vmem:[%s12] sm:$0xff]
    %v1375 = vld [vmem:[%s12 + $0x8] sm:$0xff]
    %v1376 = vld [vmem:[%s12 + $0x10] sm:$0xff]
    %v1377 = vld [vmem:[%s12 + $0x18] sm:$0xff]
    %v1378 = vld [vmem:[%s12 + $0x20] sm:$0xff]
    %v1379 = vld [vmem:[%s12 + $0x28] sm:$0xff]
    %v1380 = vld [vmem:[%s12 + $0x30] sm:$0xff]
    %v1381 = vld [vmem:[%s12 + $0x38] sm:$0xff]
    %v1382 = vld [vmem:[%s12 + $0x40] sm:$0xff]
    %v1383 = vld [vmem:[%s12 + $0x48] sm:$0xff]
    %v1384 = vld [vmem:[%s12 + $0x50] sm:$0xff]
    %v1385 = vld [vmem:[%s12 + $0x58] sm:$0xff]
    %v1386 = vld [vmem:[%s12 + $0x60] sm:$0xff]
    %v1387 = vld [vmem:[%s12 + $0x68] sm:$0xff]
    %v1388 = vld [vmem:[%s12 + $0x70] sm:$0xff]
    %v1389 = vld [vmem:[%s12 + $0x78] sm:$0xff]
    %v1390 = vld [vmem:[%s12 + $0x80] sm:$0xff]
    %v1391 = vld [vmem:[%s12 + $0x88] sm:$0xff]
    %v1392 = vld [vmem:[%s12 + $0x90] sm:$0xff]
    %v1393 = vld [vmem:[%s12 + $0x98] sm:$0xff]
    %v1394 = vld [vmem:[%s12 + $0xa0] sm:$0xff]
    %v1395 = vld [vmem:[%s12 + $0xa8] sm:$0xff]
    %v1396 = vld [vmem:[%s12 + $0xb0] sm:$0xff]
    %v1397 = vld [vmem:[%s12 + $0xb8] sm:$0xff]
    %v1398 = vld [vmem:[%s12 + $0xc0] sm:$0xff]
    %v1399 = vld [vmem:[%s12 + $0xc8] sm:$0xff]
    %v1400 = vld [vmem:[%s12 + $0xd0] sm:$0xff]
    %v1401 = vld [vmem:[%s12 + $0xd8] sm:$0xff]
    %v1402 = vld [vmem:[%s12 + $0xe0] sm:$0xff]
    %v1403 = vld [vmem:[%s12 + $0xe8] sm:$0xff]
    %v1404 = vld [vmem:[%s12 + $0xf0] sm:$0xff]
    %v1405 = vld [vmem:[%s12 + $0xf8] sm:$0xff]
    %v1406 = vld [vmem:[%s12 + $0x100] sm:$0xff]
    %v1407 = vld [vmem:[%s12 + $0x108] sm:$0xff]
    %v1408 = vld [vmem:[%s12 + $0x110] sm:$0xff]
    %v1409 = vld [vmem:[%s12 + $0x118] sm:$0xff]
    %v1410 = vld [vmem:[%s12 + $0x120] sm:$0xff]
    %v1411 = vld [vmem:[%s12 + $0x128] sm:$0xff]
    %v1412 = vld [vmem:[%s12 + $0x130] sm:$0xff]
    %v1413 = vld [vmem:[%s12 + $0x138] sm:$0xff]
    %v1414 = vld [vmem:[%s12 + $0x140] sm:$0xff]
    %v1415 = vld [vmem:[%s12 + $0x148] sm:$0xff]
    %v1416 = vld [vmem:[%s12 + $0x150] sm:$0xff]
    %v1417 = vld [vmem:[%s12 + $0x158] sm:$0xff]
    %v1418 = vld [vmem:[%s12 + $0x160] sm:$0xff]
    %v1419 = vld [vmem:[%s12 + $0x168] sm:$0xff]
    %v1420 = vld [vmem:[%s12 + $0x170] sm:$0xff]
    %v1421 = vld [vmem:[%s12 + $0x178] sm:$0xff]
    %v1422 = vld [vmem:[%s12 + $0x180] sm:$0xff]
    %v1423 = vld [vmem:[%s12 + $0x188] sm:$0xff]
    %v1424 = vld [vmem:[%s12 + $0x190] sm:$0xff]
    %v1425 = vld [vmem:[%s12 + $0x198] sm:$0xff]
    %v1426 = vld [vmem:[%s12 + $0x1a0] sm:$0xff]
    %v1427 = vld [vmem:[%s12 + $0x1a8] sm:$0xff]
    %v1428 = vld [vmem:[%s12 + $0x1b0] sm:$0xff]
    %v1429 = vld [vmem:[%s12 + $0x1b8] sm:$0xff]
    %v1430 = vld [vmem:[%s12 + $0x1c0] sm:$0xff]
    %v1431 = vld [vmem:[%s12 + $0x1c8] sm:$0xff]
    %v1432 = vld [vmem:[%s12 + $0x1d0] sm:$0xff]
    %v1433 = vld [vmem:[%s12 + $0x1d8] sm:$0xff]
    %v1434 = vld [vmem:[%s12 + $0x1e0] sm:$0xff]
    %v1435 = vld [vmem:[%s12 + $0x1e8] sm:$0xff]
    %v1436 = vld [vmem:[%s12 + $0x1f0] sm:$0xff]
    %v1437 = vld [vmem:[%s12 + $0x1f8] sm:$0xff]
    %v1438 = vld [vmem:[%s12 + $0x200] sm:$0xff]
    %v1439 = vld [vmem:[%s12 + $0x208] sm:$0xff]
    %v1440 = vld [vmem:[%s12 + $0x210] sm:$0xff]
    %v1441 = vld [vmem:[%s12 + $0x218] sm:$0xff]
    %v1442 = vld [vmem:[%s12 + $0x220] sm:$0xff]
    %v1443 = vld [vmem:[%s12 + $0x228] sm:$0xff]
    %v1444 = vld [vmem:[%s12 + $0x230] sm:$0xff]
    %v1445 = vld [vmem:[%s12 + $0x238] sm:$0xff]
    %v1446 = vld [vmem:[%s12 + $0x240] sm:$0xff]
    %v1447 = vld [vmem:[%s12 + $0x248] sm:$0xff]
    %v1448 = vld [vmem:[%s12 + $0x250] sm:$0xff]
    %v1449 = vld [vmem:[%s12 + $0x258] sm:$0xff]
    %v1450 = vld [vmem:[%s12 + $0x260] sm:$0xff]
    %v1451 = vld [vmem:[%s12 + $0x268] sm:$0xff]
    %v1452 = vld [vmem:[%s12 + $0x270] sm:$0xff]
    %v1453 = vld [vmem:[%s12 + $0x278] sm:$0xff]
    %v1454 = vld [vmem:[%s12 + $0x280] sm:$0xff]
    %v1455 = vld [vmem:[%s12 + $0x288] sm:$0xff]
    %v1456 = vld [vmem:[%s12 + $0x290] sm:$0xff]
    %v1457 = vld [vmem:[%s12 + $0x298] sm:$0xff]
    %v1458 = vld [vmem:[%s12 + $0x2a0] sm:$0xff]
    %v1459 = vld [vmem:[%s12 + $0x2a8] sm:$0xff]
    %v1460 = vld [vmem:[%s12 + $0x2b0] sm:$0xff]
    %v1461 = vld [vmem:[%s12 + $0x2b8] sm:$0xff]
    %v1462 = vld [vmem:[%s12 + $0x2c0] sm:$0xff]
    %v1463 = vld [vmem:[%s12 + $0x2c8] sm:$0xff]
    %v1464 = vld [vmem:[%s12 + $0x2d0] sm:$0xff]
    %v1465 = vld [vmem:[%s12 + $0x2d8] sm:$0xff]
    %v1466 = vld [vmem:[%s12 + $0x2e0] sm:$0xff]
    %v1467 = vld [vmem:[%s12 + $0x2e8] sm:$0xff]
    %v1468 = vld [vmem:[%s12 + $0x2f0] sm:$0xff]
    %v1469 = vld [vmem:[%s12 + $0x2f8] sm:$0xff]
    %v1470 = vld [vmem:[%s12 + $0x300] sm:$0xff]
    %v1471 = vld [vmem:[%s12 + $0x308] sm:$0xff]
    %v1472 = vld [vmem:[%s12 + $0x310] sm:$0xff]
    %v1473 = vld [vmem:[%s12 + $0x318] sm:$0xff]
    %v1474 = vld [vmem:[%s12 + $0x320] sm:$0xff]
    %v1475 = vld [vmem:[%s12 + $0x328] sm:$0xff]
    %v1476 = vld [vmem:[%s12 + $0x330] sm:$0xff]
    %v1477 = vld [vmem:[%s12 + $0x338] sm:$0xff]
    %v1478 = vld [vmem:[%s12 + $0x340] sm:$0xff]
    %v1479 = vld [vmem:[%s12 + $0x348] sm:$0xff]
    %v1480 = vld [vmem:[%s12 + $0x350] sm:$0xff]
    %v1481 = vld [vmem:[%s12 + $0x358] sm:$0xff]
    %v1482 = vld [vmem:[%s12 + $0x360] sm:$0xff]
    %v1483 = vld [vmem:[%s12 + $0x368] sm:$0xff]
    %v1484 = vld [vmem:[%s12 + $0x370] sm:$0xff]
    %v1485 = vld [vmem:[%s12 + $0x378] sm:$0xff]
    %v1486 = vld [vmem:[%s12 + $0x380] sm:$0xff]
    %v1487 = vld [vmem:[%s12 + $0x388] sm:$0xff]
    %v1488 = vld [vmem:[%s12 + $0x390] sm:$0xff]
    %v1489 = vld [vmem:[%s12 + $0x398] sm:$0xff]
    %v1490 = vld [vmem:[%s12 + $0x3a0] sm:$0xff]
    %v1491 = vld [vmem:[%s12 + $0x3a8] sm:$0xff]
    %v1492 = vld [vmem:[%s12 + $0x3b0] sm:$0xff]
    %v1493 = vld [vmem:[%s12 + $0x3b8] sm:$0xff]
    %v1494 = vld [vmem:[%s12 + $0x3c0] sm:$0xff]
    %v1495 = vld [vmem:[%s12 + $0x3c8] sm:$0xff]
    %v1496 = vld [vmem:[%s12 + $0x3d0] sm:$0xff]
    %v1497 = vld [vmem:[%s12 + $0x3d8] sm:$0xff]
    %v1498 = vld [vmem:[%s12 + $0x3e0] sm:$0xff]
    %v1499 = vld [vmem:[%s12 + $0x3e8] sm:$0xff]
    %v1500 = vld [vmem:[%s12 + $0x3f0] sm:$0xff]
    %v1501 = vld [vmem:[%s12 + $0x3f8] sm:$0xff]
    %1502 = vmatprep.subr.mxu0 0.0
    %1503 = vmatpush1.msra.mxu0 %v1374
    %1504 = vmatprep.subr.mxu0 0.0
    %1505 = vmatpush1.msra.mxu0 %v1375
    %1506 = vmatprep.subr.mxu0 0.0
    %1507 = vmatpush1.msra.mxu0 %v1376
    %1508 = vmatprep.subr.mxu0 0.0
    %1509 = vmatpush1.msra.mxu0 %v1377
    %1510 = vmatprep.subr.mxu0 0.0
    %1511 = vmatpush1.msra.mxu0 %v1378
    %1512 = vmatprep.subr.mxu0 0.0
    %1513 = vmatpush1.msra.mxu0 %v1379
    %1514 = vmatprep.subr.mxu0 0.0
    %1515 = vmatpush1.msra.mxu0 %v1380
    %1516 = vmatprep.subr.mxu0 0.0
    %1517 = vmatpush1.msra.mxu0 %v1381
    %1518 = vmatprep.subr.mxu0 0.0
    %1519 = vmatpush1.msra.mxu0 %v1382
    %1520 = vmatprep.subr.mxu0 0.0
    %1521 = vmatpush1.msra.mxu0 %v1383
    %1522 = vmatprep.subr.mxu0 0.0
    %1523 = vmatpush1.msra.mxu0 %v1384
    %1524 = vmatprep.subr.mxu0 0.0
    %1525 = vmatpush1.msra.mxu0 %v1385
    %1526 = vmatprep.subr.mxu0 0.0
    %1527 = vmatpush1.msra.mxu0 %v1386
    %1528 = vmatprep.subr.mxu0 0.0
    %1529 = vmatpush1.msra.mxu0 %v1387
    %1530 = vmatprep.subr.mxu0 0.0
    %1531 = vmatpush1.msra.mxu0 %v1388
    %1532 = vmatprep.subr.mxu0 0.0
    %1533 = vmatpush1.msra.mxu0 %v1389
    %1534 = vmatprep.subr.mxu0 0.0
    %1535 = vmatpush1.msra.mxu0 %v1390
    %1536 = vmatprep.subr.mxu0 0.0
    %1537 = vmatpush1.msra.mxu0 %v1391
    %1538 = vmatprep.subr.mxu0 0.0
    %1539 = vmatpush1.msra.mxu0 %v1392
    %1540 = vmatprep.subr.mxu0 0.0
    %1541 = vmatpush1.msra.mxu0 %v1393
    %1542 = vmatprep.subr.mxu0 0.0
    %1543 = vmatpush1.msra.mxu0 %v1394
    %1544 = vmatprep.subr.mxu0 0.0
    %1545 = vmatpush1.msra.mxu0 %v1395
    %1546 = vmatprep.subr.mxu0 0.0
    %1547 = vmatpush1.msra.mxu0 %v1396
    %1548 = vmatprep.subr.mxu0 0.0
    %1549 = vmatpush1.msra.mxu0 %v1397
    %1550 = vmatprep.subr.mxu0 0.0
    %1551 = vmatpush1.msra.mxu0 %v1398
    %1552 = vmatprep.subr.mxu0 0.0
    %1553 = vmatpush1.msra.mxu0 %v1399
    %1554 = vmatprep.subr.mxu0 0.0
    %1555 = vmatpush1.msra.mxu0 %v1400
    %1556 = vmatprep.subr.mxu0 0.0
    %1557 = vmatpush1.msra.mxu0 %v1401
    %1558 = vmatprep.subr.mxu0 0.0
    %1559 = vmatpush1.msra.mxu0 %v1402
    %1560 = vmatprep.subr.mxu0 0.0
    %1561 = vmatpush1.msra.mxu0 %v1403
    %1562 = vmatprep.subr.mxu0 0.0
    %1563 = vmatpush1.msra.mxu0 %v1404
    %1564 = vmatprep.subr.mxu0 0.0
    %1565 = vmatpush1.msra.mxu0 %v1405
    %1566 = vmatprep.mubr.f32.mxu0 %v1367
    %1567 = vmatmul.mubr.f32.gmra.mrb[0].mxu0 %v1366
    %v1568 = vpop.f32.mrb[0].mxu0
    %v1569 = vadd.f32 0.0, %v1568
    %v1570 = vpop.f32.mrb[0].mxu0
    %1571 = vdwg.mxu0
    %1572 = vmatprep.subr.mxu0 0.0
    %1573 = vmatpush1.msra.mxu0 %v1406
    %1574 = vmatprep.subr.mxu0 0.0
    %1575 = vmatpush1.msra.mxu0 %v1407
    %1576 = vmatprep.subr.mxu0 0.0
    %1577 = vmatpush1.msra.mxu0 %v1408
    %1578 = vmatprep.subr.mxu0 0.0
    %1579 = vmatpush1.msra.mxu0 %v1409
    %1580 = vmatprep.subr.mxu0 0.0
    %1581 = vmatpush1.msra.mxu0 %v1410
    %1582 = vmatprep.subr.mxu0 0.0
    %1583 = vmatpush1.msra.mxu0 %v1411
    %1584 = vmatprep.subr.mxu0 0.0
    %1585 = vmatpush1.msra.mxu0 %v1412
    %1586 = vmatprep.subr.mxu0 0.0
    %1587 = vmatpush1.msra.mxu0 %v1413
    %1588 = vmatprep.subr.mxu0 0.0
    %1589 = vmatpush1.msra.mxu0 %v1414
    %1590 = vmatprep.subr.mxu0 0.0
    %1591 = vmatpush1.msra.mxu0 %v1415
    %1592 = vmatprep.subr.mxu0 0.0
    %1593 = vmatpush1.msra.mxu0 %v1416
    %1594 = vmatprep.subr.mxu0 0.0
    %1595 = vmatpush1.msra.mxu0 %v1417
    %1596 = vmatprep.subr.mxu0 0.0
    %1597 = vmatpush1.msra.mxu0 %v1418
    %1598 = vmatprep.subr.mxu0 0.0
    %1599 = vmatpush1.msra.mxu0 %v1419
    %1600 = vmatprep.subr.mxu0 0.0
    %1601 = vmatpush1.msra.mxu0 %v1420
    %1602 = vmatprep.subr.mxu0 0.0
    %1603 = vmatpush1.msra.mxu0 %v1421
    %1604 = vmatprep.subr.mxu0 0.0
    %1605 = vmatpush1.msra.mxu0 %v1422
    %1606 = vmatprep.subr.mxu0 0.0
    %1607 = vmatpush1.msra.mxu0 %v1423
    %1608 = vmatprep.subr.mxu0 0.0
    %1609 = vmatpush1.msra.mxu0 %v1424
    %1610 = vmatprep.subr.mxu0 0.0
    %1611 = vmatpush1.msra.mxu0 %v1425
    %1612 = vmatprep.subr.mxu0 0.0
    %1613 = vmatpush1.msra.mxu0 %v1426
    %1614 = vmatprep.subr.mxu0 0.0
    %1615 = vmatpush1.msra.mxu0 %v1427
    %1616 = vmatprep.subr.mxu0 0.0
    %1617 = vmatpush1.msra.mxu0 %v1428
    %1618 = vmatprep.subr.mxu0 0.0
    %1619 = vmatpush1.msra.mxu0 %v1429
    %1620 = vmatprep.subr.mxu0 0.0
    %1621 = vmatpush1.msra.mxu0 %v1430
    %1622 = vmatprep.subr.mxu0 0.0
    %1623 = vmatpush1.msra.mxu0 %v1431
    %1624 = vmatprep.subr.mxu0 0.0
    %1625 = vmatpush1.msra.mxu0 %v1432
    %1626 = vmatprep.subr.mxu0 0.0
    %1627 = vmatpush1.msra.mxu0 %v1433
    %1628 = vmatprep.subr.mxu0 0.0
    %1629 = vmatpush1.msra.mxu0 %v1434
    %1630 = vmatprep.subr.mxu0 0.0
    %1631 = vmatpush1.msra.mxu0 %v1435
    %1632 = vmatprep.subr.mxu0 0.0
    %1633 = vmatpush1.msra.mxu0 %v1436
    %1634 = vmatprep.subr.mxu0 0.0
    %1635 = vmatpush1.msra.mxu0 %v1437
    %1636 = vmatprep.mubr.f32.mxu0 %v1369
    %1637 = vmatmul.mubr.f32.gmra.mrb[0].mxu0 %v1368
    %v1638 = vpop.f32.mrb[0].mxu0
    %v1639 = vadd.f32 %v1569, %v1638
    %v1640 = vpop.f32.mrb[0].mxu0
    %1641 = vdwg.mxu0
    %1642 = vmatprep.subr.mxu0 0.0
    %1643 = vmatpush1.msra.mxu0 %v1438
    %1644 = vmatprep.subr.mxu0 0.0
    %1645 = vmatpush1.msra.mxu0 %v1439
    %1646 = vmatprep.subr.mxu0 0.0
    %1647 = vmatpush1.msra.mxu0 %v1440
    %1648 = vmatprep.subr.mxu0 0.0
    %1649 = vmatpush1.msra.mxu0 %v1441
    %1650 = vmatprep.subr.mxu0 0.0
    %1651 = vmatpush1.msra.mxu0 %v1442
    %1652 = vmatprep.subr.mxu0 0.0
    %1653 = vmatpush1.msra.mxu0 %v1443
    %1654 = vmatprep.subr.mxu0 0.0
    %1655 = vmatpush1.msra.mxu0 %v1444
    %1656 = vmatprep.subr.mxu0 0.0
    %1657 = vmatpush1.msra.mxu0 %v1445
    %1658 = vmatprep.subr.mxu0 0.0
    %1659 = vmatpush1.msra.mxu0 %v1446
    %1660 = vmatprep.subr.mxu0 0.0
    %1661 = vmatpush1.msra.mxu0 %v1447
    %1662 = vmatprep.subr.mxu0 0.0
    %1663 = vmatpush1.msra.mxu0 %v1448
    %1664 = vmatprep.subr.mxu0 0.0
    %1665 = vmatpush1.msra.mxu0 %v1449
    %1666 = vmatprep.subr.mxu0 0.0
    %1667 = vmatpush1.msra.mxu0 %v1450
    %1668 = vmatprep.subr.mxu0 0.0
    %1669 = vmatpush1.msra.mxu0 %v1451
    %1670 = vmatprep.subr.mxu0 0.0
    %1671 = vmatpush1.msra.mxu0 %v1452
    %1672 = vmatprep.subr.mxu0 0.0
    %1673 = vmatpush1.msra.mxu0 %v1453
    %1674 = vmatprep.subr.mxu0 0.0
    %1675 = vmatpush1.msra.mxu0 %v1454
    %1676 = vmatprep.subr.mxu0 0.0
    %1677 = vmatpush1.msra.mxu0 %v1455
    %1678 = vmatprep.subr.mxu0 0.0
    %1679 = vmatpush1.msra.mxu0 %v1456
    %1680 = vmatprep.subr.mxu0 0.0
    %1681 = vmatpush1.msra.mxu0 %v1457
    %1682 = vmatprep.subr.mxu0 0.0
    %1683 = vmatpush1.msra.mxu0 %v1458
    %1684 = vmatprep.subr.mxu0 0.0
    %1685 = vmatpush1.msra.mxu0 %v1459
    %1686 = vmatprep.subr.mxu0 0.0
    %1687 = vmatpush1.msra.mxu0 %v1460
    %1688 = vmatprep.subr.mxu0 0.0
    %1689 = vmatpush1.msra.mxu0 %v1461
    %1690 = vmatprep.subr.mxu0 0.0
    %1691 = vmatpush1.msra.mxu0 %v1462
    %1692 = vmatprep.subr.mxu0 0.0
    %1693 = vmatpush1.msra.mxu0 %v1463
    %1694 = vmatprep.subr.mxu0 0.0
    %1695 = vmatpush1.msra.mxu0 %v1464
    %1696 = vmatprep.subr.mxu0 0.0
    %1697 = vmatpush1.msra.mxu0 %v1465
    %1698 = vmatprep.subr.mxu0 0.0
    %1699 = vmatpush1.msra.mxu0 %v1466
    %1700 = vmatprep.subr.mxu0 0.0
    %1701 = vmatpush1.msra.mxu0 %v1467
    %1702 = vmatprep.subr.mxu0 0.0
    %1703 = vmatpush1.msra.mxu0 %v1468
    %1704 = vmatprep.subr.mxu0 0.0
    %1705 = vmatpush1.msra.mxu0 %v1469
    %1706 = vmatprep.mubr.f32.mxu0 %v1371
    %1707 = vmatmul.mubr.f32.gmra.mrb[0].mxu0 %v1370
    %v1708 = vpop.f32.mrb[0].mxu0
    %v1709 = vadd.f32 %v1639, %v1708
    %v1710 = vpop.f32.mrb[0].mxu0
    %1711 = vdwg.mxu0
    %1712 = vmatprep.subr.mxu0 0.0
    %1713 = vmatpush1.msra.mxu0 %v1470
    %1714 = vmatprep.subr.mxu0 0.0
    %1715 = vmatpush1.msra.mxu0 %v1471
    %1716 = vmatprep.subr.mxu0 0.0
    %1717 = vmatpush1.msra.mxu0 %v1472
    %1718 = vmatprep.subr.mxu0 0.0
    %1719 = vmatpush1.msra.mxu0 %v1473
    %1720 = vmatprep.subr.mxu0 0.0
    %1721 = vmatpush1.msra.mxu0 %v1474
    %1722 = vmatprep.subr.mxu0 0.0
    %1723 = vmatpush1.msra.mxu0 %v1475
    %1724 = vmatprep.subr.mxu0 0.0
    %1725 = vmatpush1.msra.mxu0 %v1476
    %1726 = vmatprep.subr.mxu0 0.0
    %1727 = vmatpush1.msra.mxu0 %v1477
    %1728 = vmatprep.subr.mxu0 0.0
    %1729 = vmatpush1.msra.mxu0 %v1478
    %1730 = vmatprep.subr.mxu0 0.0
    %1731 = vmatpush1.msra.mxu0 %v1479
    %1732 = vmatprep.subr.mxu0 0.0
    %1733 = vmatpush1.msra.mxu0 %v1480
    %1734 = vmatprep.subr.mxu0 0.0
    %1735 = vmatpush1.msra.mxu0 %v1481
    %1736 = vmatprep.subr.mxu0 0.0
    %1737 = vmatpush1.msra.mxu0 %v1482
    %1738 = vmatprep.subr.mxu0 0.0
    %1739 = vmatpush1.msra.mxu0 %v1483
    %1740 = vmatprep.subr.mxu0 0.0
    %1741 = vmatpush1.msra.mxu0 %v1484
    %1742 = vmatprep.subr.mxu0 0.0
    %1743 = vmatpush1.msra.mxu0 %v1485
    %1744 = vmatprep.subr.mxu0 0.0
    %1745 = vmatpush1.msra.mxu0 %v1486
    %1746 = vmatprep.subr.mxu0 0.0
    %1747 = vmatpush1.msra.mxu0 %v1487
    %1748 = vmatprep.subr.mxu0 0.0
    %1749 = vmatpush1.msra.mxu0 %v1488
    %1750 = vmatprep.subr.mxu0 0.0
    %1751 = vmatpush1.msra.mxu0 %v1489
    %1752 = vmatprep.subr.mxu0 0.0
    %1753 = vmatpush1.msra.mxu0 %v1490
    %1754 = vmatprep.subr.mxu0 0.0
    %1755 = vmatpush1.msra.mxu0 %v1491
    %1756 = vmatprep.subr.mxu0 0.0
    %1757 = vmatpush1.msra.mxu0 %v1492
    %1758 = vmatprep.subr.mxu0 0.0
    %1759 = vmatpush1.msra.mxu0 %v1493
    %1760 = vmatprep.subr.mxu0 0.0
    %1761 = vmatpush1.msra.mxu0 %v1494
    %1762 = vmatprep.subr.mxu0 0.0
    %1763 = vmatpush1.msra.mxu0 %v1495
    %1764 = vmatprep.subr.mxu0 0.0
    %1765 = vmatpush1.msra.mxu0 %v1496
    %1766 = vmatprep.subr.mxu0 0.0
    %1767 = vmatpush1.msra.mxu0 %v1497
    %1768 = vmatprep.subr.mxu0 0.0
    %1769 = vmatpush1.msra.mxu0 %v1498
    %1770 = vmatprep.subr.mxu0 0.0
    %1771 = vmatpush1.msra.mxu0 %v1499
    %1772 = vmatprep.subr.mxu0 0.0
    %1773 = vmatpush1.msra.mxu0 %v1500
    %1774 = vmatprep.subr.mxu0 0.0
    %1775 = vmatpush1.msra.mxu0 %v1501
    %1776 = vmatprep.mubr.f32.mxu0 %v1373
    %1777 = vmatmul.mubr.f32.gmra.mrb[0].mxu0 %v1372
    %v1778 = vpop.f32.mrb[0].mxu0
    %v1779 = vadd.f32 %v1709, %v1778
    %v1780 = vpop.f32.mrb[0].mxu0
    %1781 = vdwg.mxu0
    %v1782 = vadd.f32 %v1357, %v1779
    %1783 = vst.msk [vmem:[#allocation5] sm:$0xff] %vm78, %v1782
    // Predicated region
    $region58: #{tpu_custom_call.1} parent=1 // pred_check
      _
    $region59: #{tpu_custom_call.1} parent=1 // pred_check_branch
      %1785 = sbr.rel (0) target = $region61
    $region60: #{tpu_custom_call.1} parent=1 // pred_region
      %s1787 = ssub.s32 128, 128
      %1788 = vsyncadd [#allocation4], %s1787
      %s1790 = sshll.u32 [#allocation3], 4
      %s1791 = int_to_ptr.vmem [resolvable:$true] %s1790
      %1793 = dma.vmem_to_hbm [thread:$0]  %s1791, 128, %s14, [#allocation4]
    $region61: #{tpu_custom_call.1} parent=1 // pred_fallthru
      _
    // Predicated region
    $region62: #{tpu_custom_call.1} parent=1 // pred_check
      _
    $region63: #{tpu_custom_call.1} parent=1 // pred_check_branch
      %1795 = sbr.rel (0) target = $region65
    $region64: #{tpu_custom_call.1} parent=1 // pred_region
      _
    $region65: #{tpu_custom_call.1} parent=1 // pred_fallthru
      _
    // Predicated region
    $region66: #{tpu_custom_call.1} parent=1 // pred_check
      _
    $region67: #{tpu_custom_call.1} parent=1 // pred_check_branch
      %1797 = sbr.rel (0) target = $region69
    $region68: #{tpu_custom_call.1} parent=1 // pred_region
      %s1799 = ssub.s32 128, 128
      %1800 = vsyncadd [#allocation6], %s1799
      %s1802 = sshll.u32 [#allocation5], 4
      %s1803 = int_to_ptr.vmem [resolvable:$true] %s1802
      %1805 = dma.vmem_to_hbm [thread:$0]  %s1803, 128, %s16, [#allocation6]
    $region69: #{tpu_custom_call.1} parent=1 // pred_fallthru
      _
    // Predicated region
    $region70: #{tpu_custom_call.1} parent=1 // pred_check
      _
    $region71: #{tpu_custom_call.1} parent=1 // pred_check_branch
      %1807 = sbr.rel (0) target = $region73
    $region72: #{tpu_custom_call.1} parent=1 // pred_region
      %s1809 = ssub.s32 128, 128
      %1810 = vsyncadd [#allocation6], %s1809
      %s1812 = sshll.u32 [#allocation7], 4
      %s1813 = int_to_ptr.vmem [resolvable:$true] %s1812
      %1815 = dma.vmem_to_hbm [thread:$0]  %s1813, 128, %s17, [#allocation6]
    $region73: #{tpu_custom_call.1} parent=1 // pred_fallthru
      _
    // Predicated region
    $region74: #{tpu_custom_call.1} parent=1 // pred_check
      _
    $region75: #{tpu_custom_call.1} parent=1 // pred_check_branch
      %1817 = sbr.rel (0) target = $region77
    $region76: #{tpu_custom_call.1} parent=1 // pred_region
      %s1819 = ssub.s32 1024, 1024
      %1820 = vsyncadd [#allocation9], %s1819
      %s1822 = sshll.u32 [#allocation8], 4
      %s1823 = int_to_ptr.vmem [resolvable:$true] %s1822
      %1825 = dma.vmem_to_hbm [thread:$0]  %s1823, 1024, %s18, [#allocation9]
    $region77: #{tpu_custom_call.1} parent=1 // pred_fallthru
      _
    // Predicated region
    $region78: #{tpu_custom_call.1} parent=1 // pred_check
      _
    $region79: #{tpu_custom_call.1} parent=1 // pred_check_branch
      %1827 = sbr.rel (0) target = $region81
    $region80: #{tpu_custom_call.1} parent=1 // pred_region
      %1828 = dma.done [#allocation4], 128
    $region81: #{tpu_custom_call.1} parent=1 // pred_fallthru
      _
    // Predicated region
    $region82: #{tpu_custom_call.1} parent=1 // pred_check
      _
    $region83: #{tpu_custom_call.1} parent=1 // pred_check_branch
      %1830 = sbr.rel (0) target = $region85
    $region84: #{tpu_custom_call.1} parent=1 // pred_region
      _
    $region85: #{tpu_custom_call.1} parent=1 // pred_fallthru
      _
    // Predicated region
    $region86: #{tpu_custom_call.1} parent=1 // pred_check
      _
    $region87: #{tpu_custom_call.1} parent=1 // pred_check_branch
      %1832 = sbr.rel (0) target = $region89
    $region88: #{tpu_custom_call.1} parent=1 // pred_region
      %1833 = dma.done [#allocation6], 128
    $region89: #{tpu_custom_call.1} parent=1 // pred_fallthru
      _
    // Predicated region
    $region90: #{tpu_custom_call.1} parent=1 // pred_check
      _
    $region91: #{tpu_custom_call.1} parent=1 // pred_check_branch
      %1835 = sbr.rel (0) target = $region93
    $region92: #{tpu_custom_call.1} parent=1 // pred_region
      %1836 = dma.done [#allocation6], 128
    $region93: #{tpu_custom_call.1} parent=1 // pred_fallthru
      _
    // Predicated region
    $region94: #{tpu_custom_call.1} parent=1 // pred_check
      _
    $region95: #{tpu_custom_call.1} parent=1 // pred_check_branch
      %1838 = sbr.rel (0) target = $region97
    $region96: #{tpu_custom_call.1} parent=1 // pred_region
      %1839 = dma.done [#allocation9], 1024
    $region97: #{tpu_custom_call.1} parent=1 // pred_fallthru
      _
    %1840 = vsyncpa [#allocation4], 1
    %1841 = vsyncpa [#allocation6], 1
    %1842 = vsyncpa [#allocation9], 1

</llo_original>
